<compile_context>
chip_gen: v6e
topology: v6e:2x2x1
jax: 0.10.0
libtpu: 0.0.40
codegen_flags: <defaults>
</compile_context>

<pallas_src>
import math

import jax
import jax.numpy as jnp
from jax.experimental import pallas as pl
from jax.experimental.pallas import tpu as pltpu


_VMEM = pl.BlockSpec(memory_space=pltpu.MemorySpace.VMEM)


def _round_up(x, m):
    return (x + m - 1) // m * m


# ----------------------- fused LSTM layer-0 + fc head kernel -----------------

def _make_lstm_head_kernel(T, B, Hp):
    """Refs: x (B, T, I) f32, wih (I, 4Hp) bf16, whh (Hp, 4Hp) bf16,
    b (1, 4Hp) f32 [= b_ih + b_hh, gate-block padded], wd (Hp, Op) bf16,
    bd (1, Op) f32  ->  out (B, Op) f32 = fc(h_T) (lane-dense, sliced later).
    Scratch: gi (T, B, 4Hp) f32."""

    def kernel(x_ref, wih_ref, whh_ref, b_ref, wd_ref, bd_ref, out_ref, gi_ref):
        # ---- Phase 1: hoisted input projection for ALL timesteps -> scratch.
        wih = wih_ref[...]                                   # (I, 4Hp) bf16
        b = b_ref[...]                                       # (1, 4Hp) f32
        xb = x_ref[...].astype(jnp.bfloat16)                 # (B, T, I)
        for t in range(T):                                   # prologue, off the
            gi_ref[t] = (jnp.dot(xb[:, t, :], wih,           # recurrent path
                                 preferred_element_type=jnp.float32) + b)

        # ---- Phase 2: serial recurrence; Whh loaded once; gate slices are
        #      lane-tile aligned (Hp multiple of 128).
        whh = whh_ref[...]                                   # (Hp, 4Hp) bf16
        h0 = jnp.zeros((B, Hp), jnp.float32)
        c0 = jnp.zeros((B, Hp), jnp.float32)

        def step(t, carry):
            h, c = carry
            gates = gi_ref[t] + jnp.dot(h.astype(jnp.bfloat16), whh,
                                        preferred_element_type=jnp.float32)
            i = jax.nn.sigmoid(gates[:, 0 * Hp:1 * Hp])
            f = jax.nn.sigmoid(gates[:, 1 * Hp:2 * Hp])
            g = jnp.tanh(gates[:, 2 * Hp:3 * Hp])
            o = jax.nn.sigmoid(gates[:, 3 * Hp:4 * Hp])
            c = f * c + i * g
            h = o * jnp.tanh(c)
            return (h, c)

        h, _ = jax.lax.fori_loop(0, T, step, (h0, c0), unroll=True)

        # ---- Phase 3: fused dense head, lane-dense (B, Op) store.
        out_ref[...] = (jnp.dot(h.astype(jnp.bfloat16), wd_ref[...],
                                preferred_element_type=jnp.float32)
                        + bd_ref[...])

    return kernel


# ------------------------------ model wrapper ---------------------------------

def lstm_model_forward(x_bti, kparams, dims):
    """Mirrors LSTMModel.forward: fc(hn[0]) with h0 = c0 = 0.
    x_bti: (B, T, I) f32 -> (B, O) f32."""
    B, T, _ = x_bti.shape
    H, Hp, O, Op = dims
    out_p = pl.pallas_call(
        _make_lstm_head_kernel(T, B, Hp),
        out_shape=jax.ShapeDtypeStruct((B, Op), jnp.float32),
        in_specs=[_VMEM] * 6,
        out_specs=_VMEM,
        scratch_shapes=[pltpu.VMEM((T, B, 4 * Hp), jnp.float32)],
        compiler_params=pltpu.CompilerParams(
            vmem_limit_bytes=32 * 1024 * 1024),   # explicit ceiling; tiny usage
    )(x_bti, kparams["wih"], kparams["whh"], kparams["b"],
      kparams["wd"], kparams["bd"])
    return out_p[:, :O]


# --------------------------------- params -------------------------------------

def init_params(key, input_dim, hidden_num, output_dim, layer_num):
    """Raw f32 params in torch.nn.LSTM / nn.Linear layout (gate order i,f,g,o)."""
    k = 1.0 / math.sqrt(hidden_num)
    layers = []
    for l in range(layer_num):
        in_dim = input_dim if l == 0 else hidden_num
        key, k1, k2, k3, k4 = jax.random.split(key, 5)
        layers.append({
            "wih": jax.random.uniform(k1, (4 * hidden_num, in_dim), jnp.float32, -k, k),
            "whh": jax.random.uniform(k2, (4 * hidden_num, hidden_num), jnp.float32, -k, k),
            "bih": jax.random.uniform(k3, (4 * hidden_num,), jnp.float32, -k, k),
            "bhh": jax.random.uniform(k4, (4 * hidden_num,), jnp.float32, -k, k),
        })
    key, k5, k6 = jax.random.split(key, 3)
    wd = jax.random.uniform(k5, (output_dim, hidden_num), jnp.float32, -k, k)
    bd = jax.random.uniform(k6, (output_dim,), jnp.float32, -k, k)
    return {"layers": layers, "fc_w": wd, "fc_b": bd}


def prepare_kernel_params(params, *, lane=128):
    """One-time weight prep for the kernel: transpose to x@W^T form, fold the
    two LSTM biases, pad H and O to full lane tiles (zeros in padded rows/cols
    keep the padded state lanes exactly 0), cast MXU operands to bf16."""
    l0 = params["layers"][0]
    wih, whh = l0["wih"], l0["whh"]
    b = l0["bih"] + l0["bhh"]
    H = whh.shape[1]
    I = wih.shape[1]
    O = params["fc_w"].shape[0]
    Hp = _round_up(H, lane)
    Op = _round_up(O, lane)

    wih_p = jnp.zeros((I, 4 * Hp), jnp.float32)
    whh_p = jnp.zeros((Hp, 4 * Hp), jnp.float32)
    b_p = jnp.zeros((1, 4 * Hp), jnp.float32)
    for g in range(4):
        wih_p = wih_p.at[:, g * Hp:g * Hp + H].set(wih[g * H:(g + 1) * H, :].T)
        whh_p = whh_p.at[:H, g * Hp:g * Hp + H].set(whh[g * H:(g + 1) * H, :].T)
        b_p = b_p.at[0, g * Hp:g * Hp + H].set(b[g * H:(g + 1) * H])

    wd_p = jnp.zeros((Hp, Op), jnp.float32).at[:H, :O].set(params["fc_w"].T)
    bd_p = jnp.zeros((1, Op), jnp.float32).at[0, :O].set(params["fc_b"])

    kparams = {
        "wih": wih_p.astype(jnp.bfloat16),
        "whh": whh_p.astype(jnp.bfloat16),
        "b": b_p,                      # f32, added to f32-accumulated matmul
        "wd": wd_p.astype(jnp.bfloat16),
        "bd": bd_p,                    # f32
    }
    return kparams, (H, Hp, O, Op)


# -------------------------------- reference ------------------------------------

def _reference_forward(x_bti, params):
    """Pure-JAX f32 mirror of torch.nn.LSTM (gate order i,f,g,o) + Linear on
    hn[0] (the first layer's final hidden state, exactly as the PyTorch forward)."""
    B, T, _ = x_bti.shape
    l0 = params["layers"][0]
    wih, whh = l0["wih"], l0["whh"]
    b = (l0["bih"] + l0["bhh"])[None, :]
    H = whh.shape[1]
    h = jnp.zeros((B, H), jnp.float32)
    c = jnp.zeros((B, H), jnp.float32)
    for t in range(T):
        gates = x_bti[:, t, :] @ wih.T + h @ whh.T + b
        i = jax.nn.sigmoid(gates[:, 0 * H:1 * H])
        f = jax.nn.sigmoid(gates[:, 1 * H:2 * H])
        g = jnp.tanh(gates[:, 2 * H:3 * H])
        o = jax.nn.sigmoid(gates[:, 3 * H:4 * H])
        c = f * c + i * g
        h = o * jnp.tanh(c)
    return h @ params["fc_w"].T + params["fc_b"][None, :]


# ----------------------------------- main --------------------------------------

if __name__ == "__main__":
    inputDim, hiddenNum, outputDim, layerNum = 4, 32, 8, 1
    seq_len, batch = 8, 2

    key = jax.random.PRNGKey(0)
    key, xkey = jax.random.split(key)
    x = jax.random.normal(xkey, (batch, seq_len, inputDim), jnp.float32)

    params = init_params(key, inputDim, hiddenNum, outputDim, layerNum)
    kparams, dims = prepare_kernel_params(params)

    out = lstm_model_forward(x, kparams, dims)
    out = jax.block_until_ready(out)

    ref = _reference_forward(x, params)
    assert out.shape == (batch, outputDim)
    # bf16 MXU operands (f32 accumulation) vs. the f32 reference -> relaxed tol.
    assert jnp.allclose(out, ref, atol=2e-2, rtol=2e-2), (
        f"mismatch vs reference: max abs err {float(jnp.max(jnp.abs(out - ref)))}")

    print("KERNEL_OK")
</pallas_src>

<mosaic_0001>
module attributes {stable_mosaic.version = 11 : i64} {
  func.func @kernel(%arg0: memref<2x8x4xf32, #tpu.memory_space<vmem>>, %arg1: memref<4x512xbf16, #tpu.memory_space<vmem>>, %arg2: memref<128x512xbf16, #tpu.memory_space<vmem>>, %arg3: memref<1x512xf32, #tpu.memory_space<vmem>>, %arg4: memref<128x128xbf16, #tpu.memory_space<vmem>>, %arg5: memref<1x128xf32, #tpu.memory_space<vmem>>, %arg6: memref<2x128xf32, #tpu.memory_space<vmem>>, %arg7: memref<8x2x512xf32, #tpu.memory_space<vmem>>) attributes {dimension_semantics = [], scalar_prefetch = 0 : i64, scratch_operands = 1 : i64, tpu.core_type = #tpu.core_type<tc>} {
    %c0 = arith.constant 0 : index
    %c0_0 = arith.constant 0 : index
    %0 = vector.load %arg1[%c0, %c0_0] : memref<4x512xbf16, #tpu.memory_space<vmem>>, vector<4x512xbf16>
    %c0_1 = arith.constant 0 : index
    %c0_2 = arith.constant 0 : index
    %1 = vector.load %arg3[%c0_1, %c0_2] : memref<1x512xf32, #tpu.memory_space<vmem>>, vector<1x512xf32>
    %c0_3 = arith.constant 0 : index
    %c0_4 = arith.constant 0 : index
    %c0_5 = arith.constant 0 : index
    %2 = vector.load %arg0[%c0_3, %c0_4, %c0_5] : memref<2x8x4xf32, #tpu.memory_space<vmem>>, vector<2x8x4xf32>
    %3 = arith.truncf %2 : vector<2x8x4xf32> to vector<2x8x4xbf16>
    %4 = vector.extract_strided_slice %3 {offsets = [0, 0, 0], sizes = [2, 1, 4], strides = [1, 1, 1]} : vector<2x8x4xbf16> to vector<2x1x4xbf16>
    %5 = vector.shape_cast %4 : vector<2x1x4xbf16> to vector<2x4xbf16>
    %cst = arith.constant dense<0.000000e+00> : vector<2x512xf32>
    %6 = tpu.matmul %5, %0, %cst {dimension_numbers = #tpu.dot_dimension_numbers<[1], [0], [0], [1], [0, 0, 1, 1], [], []>} : vector<2x4xbf16>, vector<4x512xbf16>, vector<2x512xf32> -> vector<2x512xf32>
    %7 = vector.broadcast %1 : vector<1x512xf32> to vector<2x512xf32>
    %8 = arith.addf %6, %7 : vector<2x512xf32>
    %c0_6 = arith.constant 0 : index
    %c0_7 = arith.constant 0 : index
    %c0_8 = arith.constant 0 : index
    %9 = vector.load %arg7[%c0_6, %c0_7, %c0_8] : memref<8x2x512xf32, #tpu.memory_space<vmem>>, vector<1x2x512xf32>
    %10 = vector.shape_cast %9 : vector<1x2x512xf32> to vector<2x512xf32>
    %11 = vector.shape_cast %8 : vector<2x512xf32> to vector<1x2x512xf32>
    tpu.vector_store %arg7[%c0_6, %c0_7, %c0_8], %11 {strides = array<i32>} : memref<8x2x512xf32, #tpu.memory_space<vmem>>, vector<1x2x512xf32>,
    %12 = vector.extract_strided_slice %3 {offsets = [0, 1, 0], sizes = [2, 1, 4], strides = [1, 1, 1]} : vector<2x8x4xbf16> to vector<2x1x4xbf16>
    %13 = vector.shape_cast %12 : vector<2x1x4xbf16> to vector<2x4xbf16>
    %cst_9 = arith.constant dense<0.000000e+00> : vector<2x512xf32>
    %14 = tpu.matmul %13, %0, %cst_9 {dimension_numbers = #tpu.dot_dimension_numbers<[1], [0], [0], [1], [0, 0, 1, 1], [], []>} : vector<2x4xbf16>, vector<4x512xbf16>, vector<2x512xf32> -> vector<2x512xf32>
    %15 = vector.broadcast %1 : vector<1x512xf32> to vector<2x512xf32>
    %16 = arith.addf %14, %15 : vector<2x512xf32>
    %c1 = arith.constant 1 : index
    %c0_10 = arith.constant 0 : index
    %c0_11 = arith.constant 0 : index
    %17 = vector.load %arg7[%c1, %c0_10, %c0_11] : memref<8x2x512xf32, #tpu.memory_space<vmem>>, vector<1x2x512xf32>
    %18 = vector.shape_cast %17 : vector<1x2x512xf32> to vector<2x512xf32>
    %19 = vector.shape_cast %16 : vector<2x512xf32> to vector<1x2x512xf32>
    tpu.vector_store %arg7[%c1, %c0_10, %c0_11], %19 {strides = array<i32>} : memref<8x2x512xf32, #tpu.memory_space<vmem>>, vector<1x2x512xf32>,
    %20 = vector.extract_strided_slice %3 {offsets = [0, 2, 0], sizes = [2, 1, 4], strides = [1, 1, 1]} : vector<2x8x4xbf16> to vector<2x1x4xbf16>
    %21 = vector.shape_cast %20 : vector<2x1x4xbf16> to vector<2x4xbf16>
    %cst_12 = arith.constant dense<0.000000e+00> : vector<2x512xf32>
    %22 = tpu.matmul %21, %0, %cst_12 {dimension_numbers = #tpu.dot_dimension_numbers<[1], [0], [0], [1], [0, 0, 1, 1], [], []>} : vector<2x4xbf16>, vector<4x512xbf16>, vector<2x512xf32> -> vector<2x512xf32>
    %23 = vector.broadcast %1 : vector<1x512xf32> to vector<2x512xf32>
    %24 = arith.addf %22, %23 : vector<2x512xf32>
    %c2 = arith.constant 2 : index
    %c0_13 = arith.constant 0 : index
    %c0_14 = arith.constant 0 : index
    %25 = vector.load %arg7[%c2, %c0_13, %c0_14] : memref<8x2x512xf32, #tpu.memory_space<vmem>>, vector<1x2x512xf32>
    %26 = vector.shape_cast %25 : vector<1x2x512xf32> to vector<2x512xf32>
    %27 = vector.shape_cast %24 : vector<2x512xf32> to vector<1x2x512xf32>
    tpu.vector_store %arg7[%c2, %c0_13, %c0_14], %27 {strides = array<i32>} : memref<8x2x512xf32, #tpu.memory_space<vmem>>, vector<1x2x512xf32>,
    %28 = vector.extract_strided_slice %3 {offsets = [0, 3, 0], sizes = [2, 1, 4], strides = [1, 1, 1]} : vector<2x8x4xbf16> to vector<2x1x4xbf16>
    %29 = vector.shape_cast %28 : vector<2x1x4xbf16> to vector<2x4xbf16>
    %cst_15 = arith.constant dense<0.000000e+00> : vector<2x512xf32>
    %30 = tpu.matmul %29, %0, %cst_15 {dimension_numbers = #tpu.dot_dimension_numbers<[1], [0], [0], [1], [0, 0, 1, 1], [], []>} : vector<2x4xbf16>, vector<4x512xbf16>, vector<2x512xf32> -> vector<2x512xf32>
    %31 = vector.broadcast %1 : vector<1x512xf32> to vector<2x512xf32>
    %32 = arith.addf %30, %31 : vector<2x512xf32>
    %c3 = arith.constant 3 : index
    %c0_16 = arith.constant 0 : index
    %c0_17 = arith.constant 0 : index
    %33 = vector.load %arg7[%c3, %c0_16, %c0_17] : memref<8x2x512xf32, #tpu.memory_space<vmem>>, vector<1x2x512xf32>
    %34 = vector.shape_cast %33 : vector<1x2x512xf32> to vector<2x512xf32>
    %35 = vector.shape_cast %32 : vector<2x512xf32> to vector<1x2x512xf32>
    tpu.vector_store %arg7[%c3, %c0_16, %c0_17], %35 {strides = array<i32>} : memref<8x2x512xf32, #tpu.memory_space<vmem>>, vector<1x2x512xf32>,
    %36 = vector.extract_strided_slice %3 {offsets = [0, 4, 0], sizes = [2, 1, 4], strides = [1, 1, 1]} : vector<2x8x4xbf16> to vector<2x1x4xbf16>
    %37 = vector.shape_cast %36 : vector<2x1x4xbf16> to vector<2x4xbf16>
    %cst_18 = arith.constant dense<0.000000e+00> : vector<2x512xf32>
    %38 = tpu.matmul %37, %0, %cst_18 {dimension_numbers = #tpu.dot_dimension_numbers<[1], [0], [0], [1], [0, 0, 1, 1], [], []>} : vector<2x4xbf16>, vector<4x512xbf16>, vector<2x512xf32> -> vector<2x512xf32>
    %39 = vector.broadcast %1 : vector<1x512xf32> to vector<2x512xf32>
    %40 = arith.addf %38, %39 : vector<2x512xf32>
    %c4 = arith.constant 4 : index
    %c0_19 = arith.constant 0 : index
    %c0_20 = arith.constant 0 : index
    %41 = vector.load %arg7[%c4, %c0_19, %c0_20] : memref<8x2x512xf32, #tpu.memory_space<vmem>>, vector<1x2x512xf32>
    %42 = vector.shape_cast %41 : vector<1x2x512xf32> to vector<2x512xf32>
    %43 = vector.shape_cast %40 : vector<2x512xf32> to vector<1x2x512xf32>
    tpu.vector_store %arg7[%c4, %c0_19, %c0_20], %43 {strides = array<i32>} : memref<8x2x512xf32, #tpu.memory_space<vmem>>, vector<1x2x512xf32>,
    %44 = vector.extract_strided_slice %3 {offsets = [0, 5, 0], sizes = [2, 1, 4], strides = [1, 1, 1]} : vector<2x8x4xbf16> to vector<2x1x4xbf16>
    %45 = vector.shape_cast %44 : vector<2x1x4xbf16> to vector<2x4xbf16>
    %cst_21 = arith.constant dense<0.000000e+00> : vector<2x512xf32>
    %46 = tpu.matmul %45, %0, %cst_21 {dimension_numbers = #tpu.dot_dimension_numbers<[1], [0], [0], [1], [0, 0, 1, 1], [], []>} : vector<2x4xbf16>, vector<4x512xbf16>, vector<2x512xf32> -> vector<2x512xf32>
    %47 = vector.broadcast %1 : vector<1x512xf32> to vector<2x512xf32>
    %48 = arith.addf %46, %47 : vector<2x512xf32>
    %c5 = arith.constant 5 : index
    %c0_22 = arith.constant 0 : index
    %c0_23 = arith.constant 0 : index
    %49 = vector.load %arg7[%c5, %c0_22, %c0_23] : memref<8x2x512xf32, #tpu.memory_space<vmem>>, vector<1x2x512xf32>
    %50 = vector.shape_cast %49 : vector<1x2x512xf32> to vector<2x512xf32>
    %51 = vector.shape_cast %48 : vector<2x512xf32> to vector<1x2x512xf32>
    tpu.vector_store %arg7[%c5, %c0_22, %c0_23], %51 {strides = array<i32>} : memref<8x2x512xf32, #tpu.memory_space<vmem>>, vector<1x2x512xf32>,
    %52 = vector.extract_strided_slice %3 {offsets = [0, 6, 0], sizes = [2, 1, 4], strides = [1, 1, 1]} : vector<2x8x4xbf16> to vector<2x1x4xbf16>
    %53 = vector.shape_cast %52 : vector<2x1x4xbf16> to vector<2x4xbf16>
    %cst_24 = arith.constant dense<0.000000e+00> : vector<2x512xf32>
    %54 = tpu.matmul %53, %0, %cst_24 {dimension_numbers = #tpu.dot_dimension_numbers<[1], [0], [0], [1], [0, 0, 1, 1], [], []>} : vector<2x4xbf16>, vector<4x512xbf16>, vector<2x512xf32> -> vector<2x512xf32>
    %55 = vector.broadcast %1 : vector<1x512xf32> to vector<2x512xf32>
    %56 = arith.addf %54, %55 : vector<2x512xf32>
    %c6 = arith.constant 6 : index
    %c0_25 = arith.constant 0 : index
    %c0_26 = arith.constant 0 : index
    %57 = vector.load %arg7[%c6, %c0_25, %c0_26] : memref<8x2x512xf32, #tpu.memory_space<vmem>>, vector<1x2x512xf32>
    %58 = vector.shape_cast %57 : vector<1x2x512xf32> to vector<2x512xf32>
    %59 = vector.shape_cast %56 : vector<2x512xf32> to vector<1x2x512xf32>
    tpu.vector_store %arg7[%c6, %c0_25, %c0_26], %59 {strides = array<i32>} : memref<8x2x512xf32, #tpu.memory_space<vmem>>, vector<1x2x512xf32>,
    %60 = vector.extract_strided_slice %3 {offsets = [0, 7, 0], sizes = [2, 1, 4], strides = [1, 1, 1]} : vector<2x8x4xbf16> to vector<2x1x4xbf16>
    %61 = vector.shape_cast %60 : vector<2x1x4xbf16> to vector<2x4xbf16>
    %cst_27 = arith.constant dense<0.000000e+00> : vector<2x512xf32>
    %62 = tpu.matmul %61, %0, %cst_27 {dimension_numbers = #tpu.dot_dimension_numbers<[1], [0], [0], [1], [0, 0, 1, 1], [], []>} : vector<2x4xbf16>, vector<4x512xbf16>, vector<2x512xf32> -> vector<2x512xf32>
    %63 = vector.broadcast %1 : vector<1x512xf32> to vector<2x512xf32>
    %64 = arith.addf %62, %63 : vector<2x512xf32>
    %c7 = arith.constant 7 : index
    %c0_28 = arith.constant 0 : index
    %c0_29 = arith.constant 0 : index
    %65 = vector.load %arg7[%c7, %c0_28, %c0_29] : memref<8x2x512xf32, #tpu.memory_space<vmem>>, vector<1x2x512xf32>
    %66 = vector.shape_cast %65 : vector<1x2x512xf32> to vector<2x512xf32>
    %67 = vector.shape_cast %64 : vector<2x512xf32> to vector<1x2x512xf32>
    tpu.vector_store %arg7[%c7, %c0_28, %c0_29], %67 {strides = array<i32>} : memref<8x2x512xf32, #tpu.memory_space<vmem>>, vector<1x2x512xf32>,
    %c0_30 = arith.constant 0 : index
    %c0_31 = arith.constant 0 : index
    %68 = vector.load %arg2[%c0_30, %c0_31] : memref<128x512xbf16, #tpu.memory_space<vmem>>, vector<128x512xbf16>
    %cst_32 = arith.constant 0.000000e+00 : f32
    %69 = vector.broadcast %cst_32 : f32 to vector<2x128xf32>
    %cst_33 = arith.constant 0.000000e+00 : f32
    %70 = vector.broadcast %cst_33 : f32 to vector<2x128xf32>
    %c0_i32 = arith.constant 0 : i32
    %71 = arith.index_cast %c0_i32 : i32 to index
    %c0_34 = arith.constant 0 : index
    %c0_35 = arith.constant 0 : index
    %72 = vector.load %arg7[%71, %c0_34, %c0_35] : memref<8x2x512xf32, #tpu.memory_space<vmem>>, vector<1x2x512xf32>
    %73 = vector.shape_cast %72 : vector<1x2x512xf32> to vector<2x512xf32>
    %74 = arith.truncf %69 : vector<2x128xf32> to vector<2x128xbf16>
    %cst_36 = arith.constant dense<0.000000e+00> : vector<2x512xf32>
    %75 = tpu.matmul %74, %68, %cst_36 {dimension_numbers = #tpu.dot_dimension_numbers<[1], [0], [0], [1], [0, 0, 1, 1], [], []>} : vector<2x128xbf16>, vector<128x512xbf16>, vector<2x512xf32> -> vector<2x512xf32>
    %76 = arith.addf %73, %75 : vector<2x512xf32>
    %77 = vector.extract_strided_slice %76 {offsets = [0, 0], sizes = [2, 128], strides = [1, 1]} : vector<2x512xf32> to vector<2x128xf32>
    %78 = arith.negf %77 : vector<2x128xf32>
    %79 = math.exp %78 : vector<2x128xf32>
    %cst_37 = arith.constant 1.000000e+00 : f32
    %80 = vector.broadcast %cst_37 : f32 to vector<2x128xf32>
    %81 = arith.addf %80, %79 : vector<2x128xf32>
    %82 = arith.divf %80, %81 : vector<2x128xf32>
    %83 = vector.extract_strided_slice %76 {offsets = [0, 128], sizes = [2, 128], strides = [1, 1]} : vector<2x512xf32> to vector<2x128xf32>
    %84 = arith.negf %83 : vector<2x128xf32>
    %85 = math.exp %84 : vector<2x128xf32>
    %cst_38 = arith.constant 1.000000e+00 : f32
    %86 = vector.broadcast %cst_38 : f32 to vector<2x128xf32>
    %87 = arith.addf %86, %85 : vector<2x128xf32>
    %88 = arith.divf %86, %87 : vector<2x128xf32>
    %89 = vector.extract_strided_slice %76 {offsets = [0, 256], sizes = [2, 128], strides = [1, 1]} : vector<2x512xf32> to vector<2x128xf32>
    %90 = math.tanh %89 : vector<2x128xf32>
    %91 = vector.extract_strided_slice %76 {offsets = [0, 384], sizes = [2, 128], strides = [1, 1]} : vector<2x512xf32> to vector<2x128xf32>
    %92 = arith.negf %91 : vector<2x128xf32>
    %93 = math.exp %92 : vector<2x128xf32>
    %cst_39 = arith.constant 1.000000e+00 : f32
    %94 = vector.broadcast %cst_39 : f32 to vector<2x128xf32>
    %95 = arith.addf %94, %93 : vector<2x128xf32>
    %96 = arith.divf %94, %95 : vector<2x128xf32>
    %97 = arith.mulf %88, %70 : vector<2x128xf32>
    %98 = arith.mulf %82, %90 : vector<2x128xf32>
    %99 = arith.addf %97, %98 : vector<2x128xf32>
    %100 = math.tanh %99 : vector<2x128xf32>
    %101 = arith.mulf %96, %100 : vector<2x128xf32>
    %c1_i32 = arith.constant 1 : i32
    %102 = arith.index_cast %c1_i32 : i32 to index
    %c0_40 = arith.constant 0 : index
    %c0_41 = arith.constant 0 : index
    %103 = vector.load %arg7[%102, %c0_40, %c0_41] : memref<8x2x512xf32, #tpu.memory_space<vmem>>, vector<1x2x512xf32>
    %104 = vector.shape_cast %103 : vector<1x2x512xf32> to vector<2x512xf32>
    %105 = arith.truncf %101 : vector<2x128xf32> to vector<2x128xbf16>
    %cst_42 = arith.constant dense<0.000000e+00> : vector<2x512xf32>
    %106 = tpu.matmul %105, %68, %cst_42 {dimension_numbers = #tpu.dot_dimension_numbers<[1], [0], [0], [1], [0, 0, 1, 1], [], []>} : vector<2x128xbf16>, vector<128x512xbf16>, vector<2x512xf32> -> vector<2x512xf32>
    %107 = arith.addf %104, %106 : vector<2x512xf32>
    %108 = vector.extract_strided_slice %107 {offsets = [0, 0], sizes = [2, 128], strides = [1, 1]} : vector<2x512xf32> to vector<2x128xf32>
    %109 = arith.negf %108 : vector<2x128xf32>
    %110 = math.exp %109 : vector<2x128xf32>
    %cst_43 = arith.constant 1.000000e+00 : f32
    %111 = vector.broadcast %cst_43 : f32 to vector<2x128xf32>
    %112 = arith.addf %111, %110 : vector<2x128xf32>
    %113 = arith.divf %111, %112 : vector<2x128xf32>
    %114 = vector.extract_strided_slice %107 {offsets = [0, 128], sizes = [2, 128], strides = [1, 1]} : vector<2x512xf32> to vector<2x128xf32>
    %115 = arith.negf %114 : vector<2x128xf32>
    %116 = math.exp %115 : vector<2x128xf32>
    %cst_44 = arith.constant 1.000000e+00 : f32
    %117 = vector.broadcast %cst_44 : f32 to vector<2x128xf32>
    %118 = arith.addf %117, %116 : vector<2x128xf32>
    %119 = arith.divf %117, %118 : vector<2x128xf32>
    %120 = vector.extract_strided_slice %107 {offsets = [0, 256], sizes = [2, 128], strides = [1, 1]} : vector<2x512xf32> to vector<2x128xf32>
    %121 = math.tanh %120 : vector<2x128xf32>
    %122 = vector.extract_strided_slice %107 {offsets = [0, 384], sizes = [2, 128], strides = [1, 1]} : vector<2x512xf32> to vector<2x128xf32>
    %123 = arith.negf %122 : vector<2x128xf32>
    %124 = math.exp %123 : vector<2x128xf32>
    %cst_45 = arith.constant 1.000000e+00 : f32
    %125 = vector.broadcast %cst_45 : f32 to vector<2x128xf32>
    %126 = arith.addf %125, %124 : vector<2x128xf32>
    %127 = arith.divf %125, %126 : vector<2x128xf32>
    %128 = arith.mulf %119, %99 : vector<2x128xf32>
    %129 = arith.mulf %113, %121 : vector<2x128xf32>
    %130 = arith.addf %128, %129 : vector<2x128xf32>
    %131 = math.tanh %130 : vector<2x128xf32>
    %132 = arith.mulf %127, %131 : vector<2x128xf32>
    %c2_i32 = arith.constant 2 : i32
    %133 = arith.index_cast %c2_i32 : i32 to index
    %c0_46 = arith.constant 0 : index
    %c0_47 = arith.constant 0 : index
    %134 = vector.load %arg7[%133, %c0_46, %c0_47] : memref<8x2x512xf32, #tpu.memory_space<vmem>>, vector<1x2x512xf32>
    %135 = vector.shape_cast %134 : vector<1x2x512xf32> to vector<2x512xf32>
    %136 = arith.truncf %132 : vector<2x128xf32> to vector<2x128xbf16>
    %cst_48 = arith.constant dense<0.000000e+00> : vector<2x512xf32>
    %137 = tpu.matmul %136, %68, %cst_48 {dimension_numbers = #tpu.dot_dimension_numbers<[1], [0], [0], [1], [0, 0, 1, 1], [], []>} : vector<2x128xbf16>, vector<128x512xbf16>, vector<2x512xf32> -> vector<2x512xf32>
    %138 = arith.addf %135, %137 : vector<2x512xf32>
    %139 = vector.extract_strided_slice %138 {offsets = [0, 0], sizes = [2, 128], strides = [1, 1]} : vector<2x512xf32> to vector<2x128xf32>
    %140 = arith.negf %139 : vector<2x128xf32>
    %141 = math.exp %140 : vector<2x128xf32>
    %cst_49 = arith.constant 1.000000e+00 : f32
    %142 = vector.broadcast %cst_49 : f32 to vector<2x128xf32>
    %143 = arith.addf %142, %141 : vector<2x128xf32>
    %144 = arith.divf %142, %143 : vector<2x128xf32>
    %145 = vector.extract_strided_slice %138 {offsets = [0, 128], sizes = [2, 128], strides = [1, 1]} : vector<2x512xf32> to vector<2x128xf32>
    %146 = arith.negf %145 : vector<2x128xf32>
    %147 = math.exp %146 : vector<2x128xf32>
    %cst_50 = arith.constant 1.000000e+00 : f32
    %148 = vector.broadcast %cst_50 : f32 to vector<2x128xf32>
    %149 = arith.addf %148, %147 : vector<2x128xf32>
    %150 = arith.divf %148, %149 : vector<2x128xf32>
    %151 = vector.extract_strided_slice %138 {offsets = [0, 256], sizes = [2, 128], strides = [1, 1]} : vector<2x512xf32> to vector<2x128xf32>
    %152 = math.tanh %151 : vector<2x128xf32>
    %153 = vector.extract_strided_slice %138 {offsets = [0, 384], sizes = [2, 128], strides = [1, 1]} : vector<2x512xf32> to vector<2x128xf32>
    %154 = arith.negf %153 : vector<2x128xf32>
    %155 = math.exp %154 : vector<2x128xf32>
    %cst_51 = arith.constant 1.000000e+00 : f32
    %156 = vector.broadcast %cst_51 : f32 to vector<2x128xf32>
    %157 = arith.addf %156, %155 : vector<2x128xf32>
    %158 = arith.divf %156, %157 : vector<2x128xf32>
    %159 = arith.mulf %150, %130 : vector<2x128xf32>
    %160 = arith.mulf %144, %152 : vector<2x128xf32>
    %161 = arith.addf %159, %160 : vector<2x128xf32>
    %162 = math.tanh %161 : vector<2x128xf32>
    %163 = arith.mulf %158, %162 : vector<2x128xf32>
    %c3_i32 = arith.constant 3 : i32
    %164 = arith.index_cast %c3_i32 : i32 to index
    %c0_52 = arith.constant 0 : index
    %c0_53 = arith.constant 0 : index
    %165 = vector.load %arg7[%164, %c0_52, %c0_53] : memref<8x2x512xf32, #tpu.memory_space<vmem>>, vector<1x2x512xf32>
    %166 = vector.shape_cast %165 : vector<1x2x512xf32> to vector<2x512xf32>
    %167 = arith.truncf %163 : vector<2x128xf32> to vector<2x128xbf16>
    %cst_54 = arith.constant dense<0.000000e+00> : vector<2x512xf32>
    %168 = tpu.matmul %167, %68, %cst_54 {dimension_numbers = #tpu.dot_dimension_numbers<[1], [0], [0], [1], [0, 0, 1, 1], [], []>} : vector<2x128xbf16>, vector<128x512xbf16>, vector<2x512xf32> -> vector<2x512xf32>
    %169 = arith.addf %166, %168 : vector<2x512xf32>
    %170 = vector.extract_strided_slice %169 {offsets = [0, 0], sizes = [2, 128], strides = [1, 1]} : vector<2x512xf32> to vector<2x128xf32>
    %171 = arith.negf %170 : vector<2x128xf32>
    %172 = math.exp %171 : vector<2x128xf32>
    %cst_55 = arith.constant 1.000000e+00 : f32
    %173 = vector.broadcast %cst_55 : f32 to vector<2x128xf32>
    %174 = arith.addf %173, %172 : vector<2x128xf32>
    %175 = arith.divf %173, %174 : vector<2x128xf32>
    %176 = vector.extract_strided_slice %169 {offsets = [0, 128], sizes = [2, 128], strides = [1, 1]} : vector<2x512xf32> to vector<2x128xf32>
    %177 = arith.negf %176 : vector<2x128xf32>
    %178 = math.exp %177 : vector<2x128xf32>
    %cst_56 = arith.constant 1.000000e+00 : f32
    %179 = vector.broadcast %cst_56 : f32 to vector<2x128xf32>
    %180 = arith.addf %179, %178 : vector<2x128xf32>
    %181 = arith.divf %179, %180 : vector<2x128xf32>
    %182 = vector.extract_strided_slice %169 {offsets = [0, 256], sizes = [2, 128], strides = [1, 1]} : vector<2x512xf32> to vector<2x128xf32>
    %183 = math.tanh %182 : vector<2x128xf32>
    %184 = vector.extract_strided_slice %169 {offsets = [0, 384], sizes = [2, 128], strides = [1, 1]} : vector<2x512xf32> to vector<2x128xf32>
    %185 = arith.negf %184 : vector<2x128xf32>
    %186 = math.exp %185 : vector<2x128xf32>
    %cst_57 = arith.constant 1.000000e+00 : f32
    %187 = vector.broadcast %cst_57 : f32 to vector<2x128xf32>
    %188 = arith.addf %187, %186 : vector<2x128xf32>
    %189 = arith.divf %187, %188 : vector<2x128xf32>
    %190 = arith.mulf %181, %161 : vector<2x128xf32>
    %191 = arith.mulf %175, %183 : vector<2x128xf32>
    %192 = arith.addf %190, %191 : vector<2x128xf32>
    %193 = math.tanh %192 : vector<2x128xf32>
    %194 = arith.mulf %189, %193 : vector<2x128xf32>
    %c4_i32 = arith.constant 4 : i32
    %195 = arith.index_cast %c4_i32 : i32 to index
    %c0_58 = arith.constant 0 : index
    %c0_59 = arith.constant 0 : index
    %196 = vector.load %arg7[%195, %c0_58, %c0_59] : memref<8x2x512xf32, #tpu.memory_space<vmem>>, vector<1x2x512xf32>
    %197 = vector.shape_cast %196 : vector<1x2x512xf32> to vector<2x512xf32>
    %198 = arith.truncf %194 : vector<2x128xf32> to vector<2x128xbf16>
    %cst_60 = arith.constant dense<0.000000e+00> : vector<2x512xf32>
    %199 = tpu.matmul %198, %68, %cst_60 {dimension_numbers = #tpu.dot_dimension_numbers<[1], [0], [0], [1], [0, 0, 1, 1], [], []>} : vector<2x128xbf16>, vector<128x512xbf16>, vector<2x512xf32> -> vector<2x512xf32>
    %200 = arith.addf %197, %199 : vector<2x512xf32>
    %201 = vector.extract_strided_slice %200 {offsets = [0, 0], sizes = [2, 128], strides = [1, 1]} : vector<2x512xf32> to vector<2x128xf32>
    %202 = arith.negf %201 : vector<2x128xf32>
    %203 = math.exp %202 : vector<2x128xf32>
    %cst_61 = arith.constant 1.000000e+00 : f32
    %204 = vector.broadcast %cst_61 : f32 to vector<2x128xf32>
    %205 = arith.addf %204, %203 : vector<2x128xf32>
    %206 = arith.divf %204, %205 : vector<2x128xf32>
    %207 = vector.extract_strided_slice %200 {offsets = [0, 128], sizes = [2, 128], strides = [1, 1]} : vector<2x512xf32> to vector<2x128xf32>
    %208 = arith.negf %207 : vector<2x128xf32>
    %209 = math.exp %208 : vector<2x128xf32>
    %cst_62 = arith.constant 1.000000e+00 : f32
    %210 = vector.broadcast %cst_62 : f32 to vector<2x128xf32>
    %211 = arith.addf %210, %209 : vector<2x128xf32>
    %212 = arith.divf %210, %211 : vector<2x128xf32>
    %213 = vector.extract_strided_slice %200 {offsets = [0, 256], sizes = [2, 128], strides = [1, 1]} : vector<2x512xf32> to vector<2x128xf32>
    %214 = math.tanh %213 : vector<2x128xf32>
    %215 = vector.extract_strided_slice %200 {offsets = [0, 384], sizes = [2, 128], strides = [1, 1]} : vector<2x512xf32> to vector<2x128xf32>
    %216 = arith.negf %215 : vector<2x128xf32>
    %217 = math.exp %216 : vector<2x128xf32>
    %cst_63 = arith.constant 1.000000e+00 : f32
    %218 = vector.broadcast %cst_63 : f32 to vector<2x128xf32>
    %219 = arith.addf %218, %217 : vector<2x128xf32>
    %220 = arith.divf %218, %219 : vector<2x128xf32>
    %221 = arith.mulf %212, %192 : vector<2x128xf32>
    %222 = arith.mulf %206, %214 : vector<2x128xf32>
    %223 = arith.addf %221, %222 : vector<2x128xf32>
    %224 = math.tanh %223 : vector<2x128xf32>
    %225 = arith.mulf %220, %224 : vector<2x128xf32>
    %c5_i32 = arith.constant 5 : i32
    %226 = arith.index_cast %c5_i32 : i32 to index
    %c0_64 = arith.constant 0 : index
    %c0_65 = arith.constant 0 : index
    %227 = vector.load %arg7[%226, %c0_64, %c0_65] : memref<8x2x512xf32, #tpu.memory_space<vmem>>, vector<1x2x512xf32>
    %228 = vector.shape_cast %227 : vector<1x2x512xf32> to vector<2x512xf32>
    %229 = arith.truncf %225 : vector<2x128xf32> to vector<2x128xbf16>
    %cst_66 = arith.constant dense<0.000000e+00> : vector<2x512xf32>
    %230 = tpu.matmul %229, %68, %cst_66 {dimension_numbers = #tpu.dot_dimension_numbers<[1], [0], [0], [1], [0, 0, 1, 1], [], []>} : vector<2x128xbf16>, vector<128x512xbf16>, vector<2x512xf32> -> vector<2x512xf32>
    %231 = arith.addf %228, %230 : vector<2x512xf32>
    %232 = vector.extract_strided_slice %231 {offsets = [0, 0], sizes = [2, 128], strides = [1, 1]} : vector<2x512xf32> to vector<2x128xf32>
    %233 = arith.negf %232 : vector<2x128xf32>
    %234 = math.exp %233 : vector<2x128xf32>
    %cst_67 = arith.constant 1.000000e+00 : f32
    %235 = vector.broadcast %cst_67 : f32 to vector<2x128xf32>
    %236 = arith.addf %235, %234 : vector<2x128xf32>
    %237 = arith.divf %235, %236 : vector<2x128xf32>
    %238 = vector.extract_strided_slice %231 {offsets = [0, 128], sizes = [2, 128], strides = [1, 1]} : vector<2x512xf32> to vector<2x128xf32>
    %239 = arith.negf %238 : vector<2x128xf32>
    %240 = math.exp %239 : vector<2x128xf32>
    %cst_68 = arith.constant 1.000000e+00 : f32
    %241 = vector.broadcast %cst_68 : f32 to vector<2x128xf32>
    %242 = arith.addf %241, %240 : vector<2x128xf32>
    %243 = arith.divf %241, %242 : vector<2x128xf32>
    %244 = vector.extract_strided_slice %231 {offsets = [0, 256], sizes = [2, 128], strides = [1, 1]} : vector<2x512xf32> to vector<2x128xf32>
    %245 = math.tanh %244 : vector<2x128xf32>
    %246 = vector.extract_strided_slice %231 {offsets = [0, 384], sizes = [2, 128], strides = [1, 1]} : vector<2x512xf32> to vector<2x128xf32>
    %247 = arith.negf %246 : vector<2x128xf32>
    %248 = math.exp %247 : vector<2x128xf32>
    %cst_69 = arith.constant 1.000000e+00 : f32
    %249 = vector.broadcast %cst_69 : f32 to vector<2x128xf32>
    %250 = arith.addf %249, %248 : vector<2x128xf32>
    %251 = arith.divf %249, %250 : vector<2x128xf32>
    %252 = arith.mulf %243, %223 : vector<2x128xf32>
    %253 = arith.mulf %237, %245 : vector<2x128xf32>
    %254 = arith.addf %252, %253 : vector<2x128xf32>
    %255 = math.tanh %254 : vector<2x128xf32>
    %256 = arith.mulf %251, %255 : vector<2x128xf32>
    %c6_i32 = arith.constant 6 : i32
    %257 = arith.index_cast %c6_i32 : i32 to index
    %c0_70 = arith.constant 0 : index
    %c0_71 = arith.constant 0 : index
    %258 = vector.load %arg7[%257, %c0_70, %c0_71] : memref<8x2x512xf32, #tpu.memory_space<vmem>>, vector<1x2x512xf32>
    %259 = vector.shape_cast %258 : vector<1x2x512xf32> to vector<2x512xf32>
    %260 = arith.truncf %256 : vector<2x128xf32> to vector<2x128xbf16>
    %cst_72 = arith.constant dense<0.000000e+00> : vector<2x512xf32>
    %261 = tpu.matmul %260, %68, %cst_72 {dimension_numbers = #tpu.dot_dimension_numbers<[1], [0], [0], [1], [0, 0, 1, 1], [], []>} : vector<2x128xbf16>, vector<128x512xbf16>, vector<2x512xf32> -> vector<2x512xf32>
    %262 = arith.addf %259, %261 : vector<2x512xf32>
    %263 = vector.extract_strided_slice %262 {offsets = [0, 0], sizes = [2, 128], strides = [1, 1]} : vector<2x512xf32> to vector<2x128xf32>
    %264 = arith.negf %263 : vector<2x128xf32>
    %265 = math.exp %264 : vector<2x128xf32>
    %cst_73 = arith.constant 1.000000e+00 : f32
    %266 = vector.broadcast %cst_73 : f32 to vector<2x128xf32>
    %267 = arith.addf %266, %265 : vector<2x128xf32>
    %268 = arith.divf %266, %267 : vector<2x128xf32>
    %269 = vector.extract_strided_slice %262 {offsets = [0, 128], sizes = [2, 128], strides = [1, 1]} : vector<2x512xf32> to vector<2x128xf32>
    %270 = arith.negf %269 : vector<2x128xf32>
    %271 = math.exp %270 : vector<2x128xf32>
    %cst_74 = arith.constant 1.000000e+00 : f32
    %272 = vector.broadcast %cst_74 : f32 to vector<2x128xf32>
    %273 = arith.addf %272, %271 : vector<2x128xf32>
    %274 = arith.divf %272, %273 : vector<2x128xf32>
    %275 = vector.extract_strided_slice %262 {offsets = [0, 256], sizes = [2, 128], strides = [1, 1]} : vector<2x512xf32> to vector<2x128xf32>
    %276 = math.tanh %275 : vector<2x128xf32>
    %277 = vector.extract_strided_slice %262 {offsets = [0, 384], sizes = [2, 128], strides = [1, 1]} : vector<2x512xf32> to vector<2x128xf32>
    %278 = arith.negf %277 : vector<2x128xf32>
    %279 = math.exp %278 : vector<2x128xf32>
    %cst_75 = arith.constant 1.000000e+00 : f32
    %280 = vector.broadcast %cst_75 : f32 to vector<2x128xf32>
    %281 = arith.addf %280, %279 : vector<2x128xf32>
    %282 = arith.divf %280, %281 : vector<2x128xf32>
    %283 = arith.mulf %274, %254 : vector<2x128xf32>
    %284 = arith.mulf %268, %276 : vector<2x128xf32>
    %285 = arith.addf %283, %284 : vector<2x128xf32>
    %286 = math.tanh %285 : vector<2x128xf32>
    %287 = arith.mulf %282, %286 : vector<2x128xf32>
    %c7_i32 = arith.constant 7 : i32
    %288 = arith.index_cast %c7_i32 : i32 to index
    %c0_76 = arith.constant 0 : index
    %c0_77 = arith.constant 0 : index
    %289 = vector.load %arg7[%288, %c0_76, %c0_77] : memref<8x2x512xf32, #tpu.memory_space<vmem>>, vector<1x2x512xf32>
    %290 = vector.shape_cast %289 : vector<1x2x512xf32> to vector<2x512xf32>
    %291 = arith.truncf %287 : vector<2x128xf32> to vector<2x128xbf16>
    %cst_78 = arith.constant dense<0.000000e+00> : vector<2x512xf32>
    %292 = tpu.matmul %291, %68, %cst_78 {dimension_numbers = #tpu.dot_dimension_numbers<[1], [0], [0], [1], [0, 0, 1, 1], [], []>} : vector<2x128xbf16>, vector<128x512xbf16>, vector<2x512xf32> -> vector<2x512xf32>
    %293 = arith.addf %290, %292 : vector<2x512xf32>
    %294 = vector.extract_strided_slice %293 {offsets = [0, 0], sizes = [2, 128], strides = [1, 1]} : vector<2x512xf32> to vector<2x128xf32>
    %295 = arith.negf %294 : vector<2x128xf32>
    %296 = math.exp %295 : vector<2x128xf32>
    %cst_79 = arith.constant 1.000000e+00 : f32
    %297 = vector.broadcast %cst_79 : f32 to vector<2x128xf32>
    %298 = arith.addf %297, %296 : vector<2x128xf32>
    %299 = arith.divf %297, %298 : vector<2x128xf32>
    %300 = vector.extract_strided_slice %293 {offsets = [0, 128], sizes = [2, 128], strides = [1, 1]} : vector<2x512xf32> to vector<2x128xf32>
    %301 = arith.negf %300 : vector<2x128xf32>
    %302 = math.exp %301 : vector<2x128xf32>
    %cst_80 = arith.constant 1.000000e+00 : f32
    %303 = vector.broadcast %cst_80 : f32 to vector<2x128xf32>
    %304 = arith.addf %303, %302 : vector<2x128xf32>
    %305 = arith.divf %303, %304 : vector<2x128xf32>
    %306 = vector.extract_strided_slice %293 {offsets = [0, 256], sizes = [2, 128], strides = [1, 1]} : vector<2x512xf32> to vector<2x128xf32>
    %307 = math.tanh %306 : vector<2x128xf32>
    %308 = vector.extract_strided_slice %293 {offsets = [0, 384], sizes = [2, 128], strides = [1, 1]} : vector<2x512xf32> to vector<2x128xf32>
    %309 = arith.negf %308 : vector<2x128xf32>
    %310 = math.exp %309 : vector<2x128xf32>
    %cst_81 = arith.constant 1.000000e+00 : f32
    %311 = vector.broadcast %cst_81 : f32 to vector<2x128xf32>
    %312 = arith.addf %311, %310 : vector<2x128xf32>
    %313 = arith.divf %311, %312 : vector<2x128xf32>
    %314 = arith.mulf %305, %285 : vector<2x128xf32>
    %315 = arith.mulf %299, %307 : vector<2x128xf32>
    %316 = arith.addf %314, %315 : vector<2x128xf32>
    %317 = math.tanh %316 : vector<2x128xf32>
    %318 = arith.mulf %313, %317 : vector<2x128xf32>
    %c8_i32 = arith.constant 8 : i32
    %319 = arith.truncf %318 : vector<2x128xf32> to vector<2x128xbf16>
    %c0_82 = arith.constant 0 : index
    %c0_83 = arith.constant 0 : index
    %320 = vector.load %arg4[%c0_82, %c0_83] : memref<128x128xbf16, #tpu.memory_space<vmem>>, vector<128x128xbf16>
    %cst_84 = arith.constant dense<0.000000e+00> : vector<2x128xf32>
    %321 = tpu.matmul %319, %320, %cst_84 {dimension_numbers = #tpu.dot_dimension_numbers<[1], [0], [0], [1], [0, 0, 1, 1], [], []>} : vector<2x128xbf16>, vector<128x128xbf16>, vector<2x128xf32> -> vector<2x128xf32>
    %c0_85 = arith.constant 0 : index
    %c0_86 = arith.constant 0 : index
    %322 = vector.load %arg5[%c0_85, %c0_86] : memref<1x128xf32, #tpu.memory_space<vmem>>, vector<1x128xf32>
    %323 = vector.broadcast %322 : vector<1x128xf32> to vector<2x128xf32>
    %324 = arith.addf %321, %323 : vector<2x128xf32>
    %c0_87 = arith.constant 0 : index
    %c0_88 = arith.constant 0 : index
    %325 = vector.load %arg6[%c0_87, %c0_88] : memref<2x128xf32, #tpu.memory_space<vmem>>, vector<2x128xf32>
    tpu.vector_store %arg6[%c0_87, %c0_88], %324 {strides = array<i32>} : memref<2x128xf32, #tpu.memory_space<vmem>>, vector<2x128xf32>,
    return
  }
}

</mosaic_0001>

<llo_original>
// kernel: tpu_custom_call.1
$region0: #{tpu_custom_call.1}
  #allocation0 [shape = 'u32[]', space=smem, size = 0x4, offset = 0x4, fixed_abs, tag = 'smem constant byte address 0x4 - core index']
  #allocation1 [shape = 'u32[144,128]{1,0:T(1,128)}', space=vmem, size = 0x12000, scoped, tag = 'internal scratch']
  #allocation2 [shape = 'f32[8,2,512]{2,1,0:T(2,128)}', space=vmem, size = 0x8000, scoped, tag = 'scratch operand']
  %s0 = inlined_call_operand.vmem [shape: f32[2,8,4], index: 0, kind: input, shape index: {}]
  %s1 = inlined_call_operand.vmem [shape: bf16[4,512], index: 1, kind: input, shape index: {}]
  %s2 = inlined_call_operand.hbm [shape: bf16[128,512], index: 2, kind: input, shape index: {}]
  %s3 = inlined_call_operand.vmem [shape: f32[1,512], index: 3, kind: input, shape index: {}]
  %s4 = inlined_call_operand.hbm [shape: bf16[128,128], index: 4, kind: input, shape index: {}]
  %s5 = inlined_call_operand.vmem [shape: f32[1,128], index: 5, kind: input, shape index: {}]
  %s6 = inlined_call_operand.hbm [shape: f32[2,128], index: 6, kind: output, shape index: {}]
  %s7 = sld [smem:[#allocation0]]
  $region42: #{tpu_custom_call.1} parent=0
    _
  %s9 = ssub.s32 1, %s7
  %s10 = scalar_select 0, %s9, %s7
  $region1: #{tpu_custom_call.1} parent=0
    #allocation3 [shape = 'u8[131072]{0}', space=vmem, size = 0x20000, scoped, tag = 'input window, operand 2, single buffered']
    #allocation4 [shape = 's32[1]{0}', space=sflag, size = 0x4, scoped, tag = 'scoped memory for tpu_custom_call.1']
    #allocation5 [shape = 's32[1]{0}', space=sflag, size = 0x4, scoped, tag = 'scoped memory for tpu_custom_call.1']
    #allocation6 [shape = 'u8[32768]{0}', space=vmem, size = 0x8000, scoped, tag = 'input window, operand 4, single buffered']
    #allocation7 [shape = 's32[1]{0}', space=sflag, size = 0x4, scoped, tag = 'scoped memory for tpu_custom_call.1']
    #allocation8 [shape = 'u8[1024]{0}', space=vmem, size = 0x400, scoped, tag = 'output window, operand 0, single buffered']
    %11 = vsyncpa [#allocation4], 0
    %12 = vsyncpa [#allocation7], 0
    %13 = vsyncpa [#allocation5], 0
    // Predicated region
    $region2: #{tpu_custom_call.1} parent=1 // pred_check
      _
    $region3: #{tpu_custom_call.1} parent=1 // pred_check_branch
      %15 = sbr.rel (0) target = $region5
    $region4: #{tpu_custom_call.1} parent=1 // pred_region
      _
    $region5: #{tpu_custom_call.1} parent=1 // pred_fallthru
      _
    // Predicated region
    $region6: #{tpu_custom_call.1} parent=1 // pred_check
      _
    $region7: #{tpu_custom_call.1} parent=1 // pred_check_branch
      %17 = sbr.rel (0) target = $region9
    $region8: #{tpu_custom_call.1} parent=1 // pred_region
      _
    $region9: #{tpu_custom_call.1} parent=1 // pred_fallthru
      _
    // Predicated region
    $region10: #{tpu_custom_call.1} parent=1 // pred_check
      _
    $region11: #{tpu_custom_call.1} parent=1 // pred_check_branch
      %19 = sbr.rel (0) target = $region13
    $region12: #{tpu_custom_call.1} parent=1 // pred_region
      %s21 = ssub.s32 4096, 4096
      %22 = vsyncadd [#allocation4], %s21
      %s23 = sshll.u32 [#allocation3], 4
      %s24 = int_to_ptr.vmem [resolvable:$true] %s23
      %29 = dma.hbm_to_vmem [thread:$0]  %s2, 4096, %s24, [#allocation4], 256, 256, 16
    $region13: #{tpu_custom_call.1} parent=1 // pred_fallthru
      _
    // Predicated region
    $region14: #{tpu_custom_call.1} parent=1 // pred_check
      _
    $region15: #{tpu_custom_call.1} parent=1 // pred_check_branch
      %31 = sbr.rel (0) target = $region17
    $region16: #{tpu_custom_call.1} parent=1 // pred_region
      _
    $region17: #{tpu_custom_call.1} parent=1 // pred_fallthru
      _
    // Predicated region
    $region18: #{tpu_custom_call.1} parent=1 // pred_check
      _
    $region19: #{tpu_custom_call.1} parent=1 // pred_check_branch
      %33 = sbr.rel (0) target = $region21
    $region20: #{tpu_custom_call.1} parent=1 // pred_region
      %s35 = ssub.s32 1024, 1024
      %36 = vsyncadd [#allocation7], %s35
      %s37 = sshll.u32 [#allocation6], 4
      %s38 = int_to_ptr.vmem [resolvable:$true] %s37
      %43 = dma.hbm_to_vmem [thread:$0]  %s4, 1024, %s38, [#allocation7], 64, 64, 4
    $region21: #{tpu_custom_call.1} parent=1 // pred_fallthru
      _
    // Predicated region
    $region22: #{tpu_custom_call.1} parent=1 // pred_check
      _
    $region23: #{tpu_custom_call.1} parent=1 // pred_check_branch
      %45 = sbr.rel (0) target = $region25
    $region24: #{tpu_custom_call.1} parent=1 // pred_region
      _
    $region25: #{tpu_custom_call.1} parent=1 // pred_fallthru
      _
    // Predicated region
    $region26: #{tpu_custom_call.1} parent=1 // pred_check
      _
    $region27: #{tpu_custom_call.1} parent=1 // pred_check_branch
      %47 = sbr.rel (0) target = $region29
    $region28: #{tpu_custom_call.1} parent=1 // pred_region
      %48 = dma.done [#allocation4], 4096
    $region29: #{tpu_custom_call.1} parent=1 // pred_fallthru
      _
    // Predicated region
    $region30: #{tpu_custom_call.1} parent=1 // pred_check
      _
    $region31: #{tpu_custom_call.1} parent=1 // pred_check_branch
      %50 = sbr.rel (0) target = $region33
    $region32: #{tpu_custom_call.1} parent=1 // pred_region
      %51 = dma.done [#allocation7], 1024
    $region33: #{tpu_custom_call.1} parent=1 // pred_fallthru
      _
    %v53 = vld [vmem:[%s1] sm:$0xff]
    %v54 = vld [vmem:[%s3] sm:$0xf]
    %v55 = vld [vmem:[%s0] sm:$0xff]
    %v56 = vld [vmem:[%s0 + $0x8] sm:$0xff]
    %v57 = vpack.c.bf16 %v55, %v55
    %v58 = vpack.c.bf16 %v56, %v56
    %v60 = vlaneseq
    %v61 = vshrl.u32 %v60, 7
    %v62 = vsub.s32 0, %v61
    %v63 = vrot.slane %v54, %v62
    %v64 = vlaneseq
    %v65 = vshrl.u32 %v64, 7
    %v66 = vsub.s32 1, %v65
    %v67 = vrot.slane %v54, %v66
    %v68 = vlaneseq
    %v69 = vshrl.u32 %v68, 7
    %v70 = vsub.s32 2, %v69
    %v71 = vrot.slane %v54, %v70
    %v72 = vlaneseq
    %v73 = vshrl.u32 %v72, 7
    %v74 = vsub.s32 3, %v73
    %v75 = vrot.slane %v54, %v74
    %v82 = vunpack.c.l.b16 %v57
    %v83 = vunpack.c.l.b16 %v58
    %v84 = vrot.slane %v83, 7
    %vm85 = vcmask 1041409
    %v86 = vsel %vm85, %v84, %v82
    %v87 = vpack.c.b16 %v86, %v86
    %v89 = vcombine.high %v53, %v53
    %v91 = vunpack.c.l.s4 1983009808
    %v92 = vunpack.c.0.s8 %v91
    %v93 = vlaneseq
    %v94 = vshrl.u32 %v93, 7
    %v95 = vsub.s32 %v92, %v94
    %v96 = vrot.slane %v53, %v95
    %v98 = vunpack.c.l.s4 1983009808
    %v99 = vunpack.c.0.s8 %v98
    %v100 = vlaneseq
    %v101 = vshrl.u32 %v100, 7
    %v102 = vsub.s32 %v99, %v101
    %v103 = vrot.slane %v89, %v102
    %v104 = vcombine.high %v96, %v96
    %v105 = vcombine.high %v103, %v103
    %vm106 = vcmask 31744
    %v108 = vsel %vm106, %v87, 0
    %vm110 = vcmask 1041408
    %v112 = vsel %vm110, %v96, 0
    %v115 = vsel %vm110, %v104, 0
    %v118 = vsel %vm110, %v103, 0
    %v121 = vsel %vm110, %v105, 0
    %123 = vmatprep.subr.bf16.mxu0 0
    %124 = vmatpush1.bf16.msra.mxu0 0
    %125 = vmatprep.subr.bf16.mxu0 0
    %126 = vmatpush1.bf16.msra.mxu0 0
    %127 = vmatprep.subr.bf16.mxu0 0
    %128 = vmatpush1.bf16.msra.mxu0 0
    %129 = vmatprep.subr.bf16.mxu0 0
    %130 = vmatpush1.bf16.msra.mxu0 0
    %131 = vmatprep.subr.bf16.mxu0 0
    %132 = vmatpush1.bf16.msra.mxu0 0
    %133 = vmatprep.subr.bf16.mxu0 0
    %134 = vmatpush1.bf16.msra.mxu0 0
    %135 = vmatprep.subr.bf16.mxu0 0
    %136 = vmatpush1.bf16.msra.mxu0 0
    %137 = vmatprep.subr.bf16.mxu0 %v115
    %138 = vmatpush1.bf16.msra.mxu0 %v112
    %139 = vmatprep.subr.bf16.mxu0 0
    %140 = vmatpush2.bf16.msra.mxu0 0
    %141 = vmatprep.subr.bf16.mxu0 0
    %142 = vmatpush2.bf16.msra.mxu0 0
    %143 = vmatprep.subr.bf16.mxu0 0
    %144 = vmatpush2.bf16.msra.mxu0 0
    %145 = vmatprep.subr.bf16.mxu0 0
    %146 = vmatpush2.bf16.msra.mxu0 0
    %147 = vmatprep.subr.bf16.mxu0 0
    %148 = vmatpush2.bf16.msra.mxu0 0
    %149 = vmatprep.subr.bf16.mxu0 0
    %150 = vmatpush2.bf16.msra.mxu0 0
    %151 = vmatprep.subr.bf16.mxu0 0
    %152 = vmatpush2.bf16.msra.mxu0 0
    %153 = vmatprep.subr.bf16.mxu0 0
    %154 = vmatpush2.bf16.msra.mxu0 0
    %155 = vmatprep.mubr.bf16.mxu0 0
    %156 = vmatmul.mubr.bf16.gmra.mxu0 %v108
    %v157 = vpop.f32.mrf.mxu0
    %v158 = vadd.f32 %v63, %v157
    %v159 = vpop.f32.mrf.mxu0
    %v160 = vadd.f32 %v67, %v159
    %v161 = vpop.f32.mrf.mxu0
    %v162 = vpop.f32.mrf.mxu0
    %163 = vdwg.mxu0
    %164 = vmatprep.subr.bf16.mxu0 0
    %165 = vmatpush1.bf16.msra.mxu0 0
    %166 = vmatprep.subr.bf16.mxu0 0
    %167 = vmatpush1.bf16.msra.mxu0 0
    %168 = vmatprep.subr.bf16.mxu0 0
    %169 = vmatpush1.bf16.msra.mxu0 0
    %170 = vmatprep.subr.bf16.mxu0 0
    %171 = vmatpush1.bf16.msra.mxu0 0
    %172 = vmatprep.subr.bf16.mxu0 0
    %173 = vmatpush1.bf16.msra.mxu0 0
    %174 = vmatprep.subr.bf16.mxu0 0
    %175 = vmatpush1.bf16.msra.mxu0 0
    %176 = vmatprep.subr.bf16.mxu0 0
    %177 = vmatpush1.bf16.msra.mxu0 0
    %178 = vmatprep.subr.bf16.mxu0 %v121
    %179 = vmatpush1.bf16.msra.mxu0 %v118
    %180 = vmatprep.subr.bf16.mxu0 0
    %181 = vmatpush2.bf16.msra.mxu0 0
    %182 = vmatprep.subr.bf16.mxu0 0
    %183 = vmatpush2.bf16.msra.mxu0 0
    %184 = vmatprep.subr.bf16.mxu0 0
    %185 = vmatpush2.bf16.msra.mxu0 0
    %186 = vmatprep.subr.bf16.mxu0 0
    %187 = vmatpush2.bf16.msra.mxu0 0
    %188 = vmatprep.subr.bf16.mxu0 0
    %189 = vmatpush2.bf16.msra.mxu0 0
    %190 = vmatprep.subr.bf16.mxu0 0
    %191 = vmatpush2.bf16.msra.mxu0 0
    %192 = vmatprep.subr.bf16.mxu0 0
    %193 = vmatpush2.bf16.msra.mxu0 0
    %194 = vmatprep.subr.bf16.mxu0 0
    %195 = vmatpush2.bf16.msra.mxu0 0
    %196 = vmatprep.mubr.bf16.mxu0 0
    %197 = vmatmul.mubr.bf16.gmra.mxu0 %v108
    %v198 = vpop.f32.mrf.mxu0
    %v199 = vadd.f32 %v71, %v198
    %v200 = vpop.f32.mrf.mxu0
    %v201 = vadd.f32 %v75, %v200
    %v202 = vpop.f32.mrf.mxu0
    %v203 = vpop.f32.mrf.mxu0
    %204 = vdwg.mxu0
    %v209 = vcombine.low %v158, %v160
    %v210 = vcombine.low %v199, %v201
    %v212 = vunpack.c.l.s4 1983009808
    %v213 = vunpack.c.0.s8 %v212
    %v214 = vlaneseq
    %v215 = vshrl.u32 %v214, 7
    %v216 = vsub.s32 %v213, %v215
    %v217 = vrot.slane %v209, %v216
    %v219 = vunpack.c.l.s4 1983009808
    %v220 = vunpack.c.0.s8 %v219
    %v221 = vlaneseq
    %v222 = vshrl.u32 %v221, 7
    %v223 = vsub.s32 %v220, %v222
    %v224 = vrot.slane %v210, %v223
    %v225 = vcombine.low %v217, %v224
    %227 = vst [vmem:[#allocation2] sm:$0xff] %v225
    %v228 = vrot.slane %v82, 1
    %v229 = vsel %vm85, %v83, %v228
    %v230 = vpack.c.b16 %v229, %v229
    %v232 = vsel %vm106, %v230, 0
    %234 = vmatprep.subr.bf16.mxu0 0
    %235 = vmatpush1.bf16.msra.mxu0 0
    %236 = vmatprep.subr.bf16.mxu0 0
    %237 = vmatpush1.bf16.msra.mxu0 0
    %238 = vmatprep.subr.bf16.mxu0 0
    %239 = vmatpush1.bf16.msra.mxu0 0
    %240 = vmatprep.subr.bf16.mxu0 0
    %241 = vmatpush1.bf16.msra.mxu0 0
    %242 = vmatprep.subr.bf16.mxu0 0
    %243 = vmatpush1.bf16.msra.mxu0 0
    %244 = vmatprep.subr.bf16.mxu0 0
    %245 = vmatpush1.bf16.msra.mxu0 0
    %246 = vmatprep.subr.bf16.mxu0 0
    %247 = vmatpush1.bf16.msra.mxu0 0
    %248 = vmatprep.subr.bf16.mxu0 %v115
    %249 = vmatpush1.bf16.msra.mxu0 %v112
    %250 = vmatprep.subr.bf16.mxu0 0
    %251 = vmatpush2.bf16.msra.mxu0 0
    %252 = vmatprep.subr.bf16.mxu0 0
    %253 = vmatpush2.bf16.msra.mxu0 0
    %254 = vmatprep.subr.bf16.mxu0 0
    %255 = vmatpush2.bf16.msra.mxu0 0
    %256 = vmatprep.subr.bf16.mxu0 0
    %257 = vmatpush2.bf16.msra.mxu0 0
    %258 = vmatprep.subr.bf16.mxu0 0
    %259 = vmatpush2.bf16.msra.mxu0 0
    %260 = vmatprep.subr.bf16.mxu0 0
    %261 = vmatpush2.bf16.msra.mxu0 0
    %262 = vmatprep.subr.bf16.mxu0 0
    %263 = vmatpush2.bf16.msra.mxu0 0
    %264 = vmatprep.subr.bf16.mxu0 0
    %265 = vmatpush2.bf16.msra.mxu0 0
    %266 = vmatprep.mubr.bf16.mxu0 0
    %267 = vmatmul.mubr.bf16.gmra.mxu0 %v232
    %v268 = vpop.f32.mrf.mxu0
    %v269 = vadd.f32 %v63, %v268
    %v270 = vpop.f32.mrf.mxu0
    %v271 = vadd.f32 %v67, %v270
    %v272 = vpop.f32.mrf.mxu0
    %v273 = vpop.f32.mrf.mxu0
    %274 = vdwg.mxu0
    %275 = vmatprep.subr.bf16.mxu0 0
    %276 = vmatpush1.bf16.msra.mxu0 0
    %277 = vmatprep.subr.bf16.mxu0 0
    %278 = vmatpush1.bf16.msra.mxu0 0
    %279 = vmatprep.subr.bf16.mxu0 0
    %280 = vmatpush1.bf16.msra.mxu0 0
    %281 = vmatprep.subr.bf16.mxu0 0
    %282 = vmatpush1.bf16.msra.mxu0 0
    %283 = vmatprep.subr.bf16.mxu0 0
    %284 = vmatpush1.bf16.msra.mxu0 0
    %285 = vmatprep.subr.bf16.mxu0 0
    %286 = vmatpush1.bf16.msra.mxu0 0
    %287 = vmatprep.subr.bf16.mxu0 0
    %288 = vmatpush1.bf16.msra.mxu0 0
    %289 = vmatprep.subr.bf16.mxu0 %v121
    %290 = vmatpush1.bf16.msra.mxu0 %v118
    %291 = vmatprep.subr.bf16.mxu0 0
    %292 = vmatpush2.bf16.msra.mxu0 0
    %293 = vmatprep.subr.bf16.mxu0 0
    %294 = vmatpush2.bf16.msra.mxu0 0
    %295 = vmatprep.subr.bf16.mxu0 0
    %296 = vmatpush2.bf16.msra.mxu0 0
    %297 = vmatprep.subr.bf16.mxu0 0
    %298 = vmatpush2.bf16.msra.mxu0 0
    %299 = vmatprep.subr.bf16.mxu0 0
    %300 = vmatpush2.bf16.msra.mxu0 0
    %301 = vmatprep.subr.bf16.mxu0 0
    %302 = vmatpush2.bf16.msra.mxu0 0
    %303 = vmatprep.subr.bf16.mxu0 0
    %304 = vmatpush2.bf16.msra.mxu0 0
    %305 = vmatprep.subr.bf16.mxu0 0
    %306 = vmatpush2.bf16.msra.mxu0 0
    %307 = vmatprep.mubr.bf16.mxu0 0
    %308 = vmatmul.mubr.bf16.gmra.mxu0 %v232
    %v309 = vpop.f32.mrf.mxu0
    %v310 = vadd.f32 %v71, %v309
    %v311 = vpop.f32.mrf.mxu0
    %v312 = vadd.f32 %v75, %v311
    %v313 = vpop.f32.mrf.mxu0
    %v314 = vpop.f32.mrf.mxu0
    %315 = vdwg.mxu0
    %v320 = vcombine.low %v269, %v271
    %v321 = vcombine.low %v310, %v312
    %v323 = vunpack.c.l.s4 1983009808
    %v324 = vunpack.c.0.s8 %v323
    %v325 = vlaneseq
    %v326 = vshrl.u32 %v325, 7
    %v327 = vsub.s32 %v324, %v326
    %v328 = vrot.slane %v320, %v327
    %v330 = vunpack.c.l.s4 1983009808
    %v331 = vunpack.c.0.s8 %v330
    %v332 = vlaneseq
    %v333 = vshrl.u32 %v332, 7
    %v334 = vsub.s32 %v331, %v333
    %v335 = vrot.slane %v321, %v334
    %v336 = vcombine.low %v328, %v335
    %s338 = scalar_lea.vmem [#allocation2], 8
    %339 = vst [vmem:[%s338] sm:$0xff] %v336
    %v340 = vrot.slane %v82, 2
    %v341 = vrot.slane %v83, 1
    %v342 = vsel %vm85, %v341, %v340
    %v343 = vpack.c.b16 %v342, %v342
    %v345 = vsel %vm106, %v343, 0
    %347 = vmatprep.subr.bf16.mxu0 0
    %348 = vmatpush1.bf16.msra.mxu0 0
    %349 = vmatprep.subr.bf16.mxu0 0
    %350 = vmatpush1.bf16.msra.mxu0 0
    %351 = vmatprep.subr.bf16.mxu0 0
    %352 = vmatpush1.bf16.msra.mxu0 0
    %353 = vmatprep.subr.bf16.mxu0 0
    %354 = vmatpush1.bf16.msra.mxu0 0
    %355 = vmatprep.subr.bf16.mxu0 0
    %356 = vmatpush1.bf16.msra.mxu0 0
    %357 = vmatprep.subr.bf16.mxu0 0
    %358 = vmatpush1.bf16.msra.mxu0 0
    %359 = vmatprep.subr.bf16.mxu0 0
    %360 = vmatpush1.bf16.msra.mxu0 0
    %361 = vmatprep.subr.bf16.mxu0 %v115
    %362 = vmatpush1.bf16.msra.mxu0 %v112
    %363 = vmatprep.subr.bf16.mxu0 0
    %364 = vmatpush2.bf16.msra.mxu0 0
    %365 = vmatprep.subr.bf16.mxu0 0
    %366 = vmatpush2.bf16.msra.mxu0 0
    %367 = vmatprep.subr.bf16.mxu0 0
    %368 = vmatpush2.bf16.msra.mxu0 0
    %369 = vmatprep.subr.bf16.mxu0 0
    %370 = vmatpush2.bf16.msra.mxu0 0
    %371 = vmatprep.subr.bf16.mxu0 0
    %372 = vmatpush2.bf16.msra.mxu0 0
    %373 = vmatprep.subr.bf16.mxu0 0
    %374 = vmatpush2.bf16.msra.mxu0 0
    %375 = vmatprep.subr.bf16.mxu0 0
    %376 = vmatpush2.bf16.msra.mxu0 0
    %377 = vmatprep.subr.bf16.mxu0 0
    %378 = vmatpush2.bf16.msra.mxu0 0
    %379 = vmatprep.mubr.bf16.mxu0 0
    %380 = vmatmul.mubr.bf16.gmra.mxu0 %v345
    %v381 = vpop.f32.mrf.mxu0
    %v382 = vadd.f32 %v63, %v381
    %v383 = vpop.f32.mrf.mxu0
    %v384 = vadd.f32 %v67, %v383
    %v385 = vpop.f32.mrf.mxu0
    %v386 = vpop.f32.mrf.mxu0
    %387 = vdwg.mxu0
    %388 = vmatprep.subr.bf16.mxu0 0
    %389 = vmatpush1.bf16.msra.mxu0 0
    %390 = vmatprep.subr.bf16.mxu0 0
    %391 = vmatpush1.bf16.msra.mxu0 0
    %392 = vmatprep.subr.bf16.mxu0 0
    %393 = vmatpush1.bf16.msra.mxu0 0
    %394 = vmatprep.subr.bf16.mxu0 0
    %395 = vmatpush1.bf16.msra.mxu0 0
    %396 = vmatprep.subr.bf16.mxu0 0
    %397 = vmatpush1.bf16.msra.mxu0 0
    %398 = vmatprep.subr.bf16.mxu0 0
    %399 = vmatpush1.bf16.msra.mxu0 0
    %400 = vmatprep.subr.bf16.mxu0 0
    %401 = vmatpush1.bf16.msra.mxu0 0
    %402 = vmatprep.subr.bf16.mxu0 %v121
    %403 = vmatpush1.bf16.msra.mxu0 %v118
    %404 = vmatprep.subr.bf16.mxu0 0
    %405 = vmatpush2.bf16.msra.mxu0 0
    %406 = vmatprep.subr.bf16.mxu0 0
    %407 = vmatpush2.bf16.msra.mxu0 0
    %408 = vmatprep.subr.bf16.mxu0 0
    %409 = vmatpush2.bf16.msra.mxu0 0
    %410 = vmatprep.subr.bf16.mxu0 0
    %411 = vmatpush2.bf16.msra.mxu0 0
    %412 = vmatprep.subr.bf16.mxu0 0
    %413 = vmatpush2.bf16.msra.mxu0 0
    %414 = vmatprep.subr.bf16.mxu0 0
    %415 = vmatpush2.bf16.msra.mxu0 0
    %416 = vmatprep.subr.bf16.mxu0 0
    %417 = vmatpush2.bf16.msra.mxu0 0
    %418 = vmatprep.subr.bf16.mxu0 0
    %419 = vmatpush2.bf16.msra.mxu0 0
    %420 = vmatprep.mubr.bf16.mxu0 0
    %421 = vmatmul.mubr.bf16.gmra.mxu0 %v345
    %v422 = vpop.f32.mrf.mxu0
    %v423 = vadd.f32 %v71, %v422
    %v424 = vpop.f32.mrf.mxu0
    %v425 = vadd.f32 %v75, %v424
    %v426 = vpop.f32.mrf.mxu0
    %v427 = vpop.f32.mrf.mxu0
    %428 = vdwg.mxu0
    %v433 = vcombine.low %v382, %v384
    %v434 = vcombine.low %v423, %v425
    %v436 = vunpack.c.l.s4 1983009808
    %v437 = vunpack.c.0.s8 %v436
    %v438 = vlaneseq
    %v439 = vshrl.u32 %v438, 7
    %v440 = vsub.s32 %v437, %v439
    %v441 = vrot.slane %v433, %v440
    %v443 = vunpack.c.l.s4 1983009808
    %v444 = vunpack.c.0.s8 %v443
    %v445 = vlaneseq
    %v446 = vshrl.u32 %v445, 7
    %v447 = vsub.s32 %v444, %v446
    %v448 = vrot.slane %v434, %v447
    %v449 = vcombine.low %v441, %v448
    %s451 = scalar_lea.vmem [#allocation2], 16
    %452 = vst [vmem:[%s451] sm:$0xff] %v449
    %v453 = vrot.slane %v82, 3
    %v454 = vrot.slane %v83, 2
    %v455 = vsel %vm85, %v454, %v453
    %v456 = vpack.c.b16 %v455, %v455
    %v458 = vsel %vm106, %v456, 0
    %460 = vmatprep.subr.bf16.mxu0 0
    %461 = vmatpush1.bf16.msra.mxu0 0
    %462 = vmatprep.subr.bf16.mxu0 0
    %463 = vmatpush1.bf16.msra.mxu0 0
    %464 = vmatprep.subr.bf16.mxu0 0
    %465 = vmatpush1.bf16.msra.mxu0 0
    %466 = vmatprep.subr.bf16.mxu0 0
    %467 = vmatpush1.bf16.msra.mxu0 0
    %468 = vmatprep.subr.bf16.mxu0 0
    %469 = vmatpush1.bf16.msra.mxu0 0
    %470 = vmatprep.subr.bf16.mxu0 0
    %471 = vmatpush1.bf16.msra.mxu0 0
    %472 = vmatprep.subr.bf16.mxu0 0
    %473 = vmatpush1.bf16.msra.mxu0 0
    %474 = vmatprep.subr.bf16.mxu0 %v115
    %475 = vmatpush1.bf16.msra.mxu0 %v112
    %476 = vmatprep.subr.bf16.mxu0 0
    %477 = vmatpush2.bf16.msra.mxu0 0
    %478 = vmatprep.subr.bf16.mxu0 0
    %479 = vmatpush2.bf16.msra.mxu0 0
    %480 = vmatprep.subr.bf16.mxu0 0
    %481 = vmatpush2.bf16.msra.mxu0 0
    %482 = vmatprep.subr.bf16.mxu0 0
    %483 = vmatpush2.bf16.msra.mxu0 0
    %484 = vmatprep.subr.bf16.mxu0 0
    %485 = vmatpush2.bf16.msra.mxu0 0
    %486 = vmatprep.subr.bf16.mxu0 0
    %487 = vmatpush2.bf16.msra.mxu0 0
    %488 = vmatprep.subr.bf16.mxu0 0
    %489 = vmatpush2.bf16.msra.mxu0 0
    %490 = vmatprep.subr.bf16.mxu0 0
    %491 = vmatpush2.bf16.msra.mxu0 0
    %492 = vmatprep.mubr.bf16.mxu0 0
    %493 = vmatmul.mubr.bf16.gmra.mxu0 %v458
    %v494 = vpop.f32.mrf.mxu0
    %v495 = vadd.f32 %v63, %v494
    %v496 = vpop.f32.mrf.mxu0
    %v497 = vadd.f32 %v67, %v496
    %v498 = vpop.f32.mrf.mxu0
    %v499 = vpop.f32.mrf.mxu0
    %500 = vdwg.mxu0
    %501 = vmatprep.subr.bf16.mxu0 0
    %502 = vmatpush1.bf16.msra.mxu0 0
    %503 = vmatprep.subr.bf16.mxu0 0
    %504 = vmatpush1.bf16.msra.mxu0 0
    %505 = vmatprep.subr.bf16.mxu0 0
    %506 = vmatpush1.bf16.msra.mxu0 0
    %507 = vmatprep.subr.bf16.mxu0 0
    %508 = vmatpush1.bf16.msra.mxu0 0
    %509 = vmatprep.subr.bf16.mxu0 0
    %510 = vmatpush1.bf16.msra.mxu0 0
    %511 = vmatprep.subr.bf16.mxu0 0
    %512 = vmatpush1.bf16.msra.mxu0 0
    %513 = vmatprep.subr.bf16.mxu0 0
    %514 = vmatpush1.bf16.msra.mxu0 0
    %515 = vmatprep.subr.bf16.mxu0 %v121
    %516 = vmatpush1.bf16.msra.mxu0 %v118
    %517 = vmatprep.subr.bf16.mxu0 0
    %518 = vmatpush2.bf16.msra.mxu0 0
    %519 = vmatprep.subr.bf16.mxu0 0
    %520 = vmatpush2.bf16.msra.mxu0 0
    %521 = vmatprep.subr.bf16.mxu0 0
    %522 = vmatpush2.bf16.msra.mxu0 0
    %523 = vmatprep.subr.bf16.mxu0 0
    %524 = vmatpush2.bf16.msra.mxu0 0
    %525 = vmatprep.subr.bf16.mxu0 0
    %526 = vmatpush2.bf16.msra.mxu0 0
    %527 = vmatprep.subr.bf16.mxu0 0
    %528 = vmatpush2.bf16.msra.mxu0 0
    %529 = vmatprep.subr.bf16.mxu0 0
    %530 = vmatpush2.bf16.msra.mxu0 0
    %531 = vmatprep.subr.bf16.mxu0 0
    %532 = vmatpush2.bf16.msra.mxu0 0
    %533 = vmatprep.mubr.bf16.mxu0 0
    %534 = vmatmul.mubr.bf16.gmra.mxu0 %v458
    %v535 = vpop.f32.mrf.mxu0
    %v536 = vadd.f32 %v71, %v535
    %v537 = vpop.f32.mrf.mxu0
    %v538 = vadd.f32 %v75, %v537
    %v539 = vpop.f32.mrf.mxu0
    %v540 = vpop.f32.mrf.mxu0
    %541 = vdwg.mxu0
    %v546 = vcombine.low %v495, %v497
    %v547 = vcombine.low %v536, %v538
    %v549 = vunpack.c.l.s4 1983009808
    %v550 = vunpack.c.0.s8 %v549
    %v551 = vlaneseq
    %v552 = vshrl.u32 %v551, 7
    %v553 = vsub.s32 %v550, %v552
    %v554 = vrot.slane %v546, %v553
    %v556 = vunpack.c.l.s4 1983009808
    %v557 = vunpack.c.0.s8 %v556
    %v558 = vlaneseq
    %v559 = vshrl.u32 %v558, 7
    %v560 = vsub.s32 %v557, %v559
    %v561 = vrot.slane %v547, %v560
    %v562 = vcombine.low %v554, %v561
    %s564 = scalar_lea.vmem [#allocation2], 24
    %565 = vst [vmem:[%s564] sm:$0xff] %v562
    %v566 = vrot.slane %v82, 4
    %v567 = vrot.slane %v83, 3
    %v568 = vsel %vm85, %v567, %v566
    %v569 = vpack.c.b16 %v568, %v568
    %v571 = vsel %vm106, %v569, 0
    %573 = vmatprep.subr.bf16.mxu0 0
    %574 = vmatpush1.bf16.msra.mxu0 0
    %575 = vmatprep.subr.bf16.mxu0 0
    %576 = vmatpush1.bf16.msra.mxu0 0
    %577 = vmatprep.subr.bf16.mxu0 0
    %578 = vmatpush1.bf16.msra.mxu0 0
    %579 = vmatprep.subr.bf16.mxu0 0
    %580 = vmatpush1.bf16.msra.mxu0 0
    %581 = vmatprep.subr.bf16.mxu0 0
    %582 = vmatpush1.bf16.msra.mxu0 0
    %583 = vmatprep.subr.bf16.mxu0 0
    %584 = vmatpush1.bf16.msra.mxu0 0
    %585 = vmatprep.subr.bf16.mxu0 0
    %586 = vmatpush1.bf16.msra.mxu0 0
    %587 = vmatprep.subr.bf16.mxu0 %v115
    %588 = vmatpush1.bf16.msra.mxu0 %v112
    %589 = vmatprep.subr.bf16.mxu0 0
    %590 = vmatpush2.bf16.msra.mxu0 0
    %591 = vmatprep.subr.bf16.mxu0 0
    %592 = vmatpush2.bf16.msra.mxu0 0
    %593 = vmatprep.subr.bf16.mxu0 0
    %594 = vmatpush2.bf16.msra.mxu0 0
    %595 = vmatprep.subr.bf16.mxu0 0
    %596 = vmatpush2.bf16.msra.mxu0 0
    %597 = vmatprep.subr.bf16.mxu0 0
    %598 = vmatpush2.bf16.msra.mxu0 0
    %599 = vmatprep.subr.bf16.mxu0 0
    %600 = vmatpush2.bf16.msra.mxu0 0
    %601 = vmatprep.subr.bf16.mxu0 0
    %602 = vmatpush2.bf16.msra.mxu0 0
    %603 = vmatprep.subr.bf16.mxu0 0
    %604 = vmatpush2.bf16.msra.mxu0 0
    %605 = vmatprep.mubr.bf16.mxu0 0
    %606 = vmatmul.mubr.bf16.gmra.mxu0 %v571
    %v607 = vpop.f32.mrf.mxu0
    %v608 = vadd.f32 %v63, %v607
    %v609 = vpop.f32.mrf.mxu0
    %v610 = vadd.f32 %v67, %v609
    %v611 = vpop.f32.mrf.mxu0
    %v612 = vpop.f32.mrf.mxu0
    %613 = vdwg.mxu0
    %614 = vmatprep.subr.bf16.mxu0 0
    %615 = vmatpush1.bf16.msra.mxu0 0
    %616 = vmatprep.subr.bf16.mxu0 0
    %617 = vmatpush1.bf16.msra.mxu0 0
    %618 = vmatprep.subr.bf16.mxu0 0
    %619 = vmatpush1.bf16.msra.mxu0 0
    %620 = vmatprep.subr.bf16.mxu0 0
    %621 = vmatpush1.bf16.msra.mxu0 0
    %622 = vmatprep.subr.bf16.mxu0 0
    %623 = vmatpush1.bf16.msra.mxu0 0
    %624 = vmatprep.subr.bf16.mxu0 0
    %625 = vmatpush1.bf16.msra.mxu0 0
    %626 = vmatprep.subr.bf16.mxu0 0
    %627 = vmatpush1.bf16.msra.mxu0 0
    %628 = vmatprep.subr.bf16.mxu0 %v121
    %629 = vmatpush1.bf16.msra.mxu0 %v118
    %630 = vmatprep.subr.bf16.mxu0 0
    %631 = vmatpush2.bf16.msra.mxu0 0
    %632 = vmatprep.subr.bf16.mxu0 0
    %633 = vmatpush2.bf16.msra.mxu0 0
    %634 = vmatprep.subr.bf16.mxu0 0
    %635 = vmatpush2.bf16.msra.mxu0 0
    %636 = vmatprep.subr.bf16.mxu0 0
    %637 = vmatpush2.bf16.msra.mxu0 0
    %638 = vmatprep.subr.bf16.mxu0 0
    %639 = vmatpush2.bf16.msra.mxu0 0
    %640 = vmatprep.subr.bf16.mxu0 0
    %641 = vmatpush2.bf16.msra.mxu0 0
    %642 = vmatprep.subr.bf16.mxu0 0
    %643 = vmatpush2.bf16.msra.mxu0 0
    %644 = vmatprep.subr.bf16.mxu0 0
    %645 = vmatpush2.bf16.msra.mxu0 0
    %646 = vmatprep.mubr.bf16.mxu0 0
    %647 = vmatmul.mubr.bf16.gmra.mxu0 %v571
    %v648 = vpop.f32.mrf.mxu0
    %v649 = vadd.f32 %v71, %v648
    %v650 = vpop.f32.mrf.mxu0
    %v651 = vadd.f32 %v75, %v650
    %v652 = vpop.f32.mrf.mxu0
    %v653 = vpop.f32.mrf.mxu0
    %654 = vdwg.mxu0
    %v659 = vcombine.low %v608, %v610
    %v660 = vcombine.low %v649, %v651
    %v662 = vunpack.c.l.s4 1983009808
    %v663 = vunpack.c.0.s8 %v662
    %v664 = vlaneseq
    %v665 = vshrl.u32 %v664, 7
    %v666 = vsub.s32 %v663, %v665
    %v667 = vrot.slane %v659, %v666
    %v669 = vunpack.c.l.s4 1983009808
    %v670 = vunpack.c.0.s8 %v669
    %v671 = vlaneseq
    %v672 = vshrl.u32 %v671, 7
    %v673 = vsub.s32 %v670, %v672
    %v674 = vrot.slane %v660, %v673
    %v675 = vcombine.low %v667, %v674
    %s677 = scalar_lea.vmem [#allocation2], 32
    %678 = vst [vmem:[%s677] sm:$0xff] %v675
    %v679 = vrot.slane %v82, 5
    %v680 = vrot.slane %v83, 4
    %v681 = vsel %vm85, %v680, %v679
    %v682 = vpack.c.b16 %v681, %v681
    %v684 = vsel %vm106, %v682, 0
    %686 = vmatprep.subr.bf16.mxu0 0
    %687 = vmatpush1.bf16.msra.mxu0 0
    %688 = vmatprep.subr.bf16.mxu0 0
    %689 = vmatpush1.bf16.msra.mxu0 0
    %690 = vmatprep.subr.bf16.mxu0 0
    %691 = vmatpush1.bf16.msra.mxu0 0
    %692 = vmatprep.subr.bf16.mxu0 0
    %693 = vmatpush1.bf16.msra.mxu0 0
    %694 = vmatprep.subr.bf16.mxu0 0
    %695 = vmatpush1.bf16.msra.mxu0 0
    %696 = vmatprep.subr.bf16.mxu0 0
    %697 = vmatpush1.bf16.msra.mxu0 0
    %698 = vmatprep.subr.bf16.mxu0 0
    %699 = vmatpush1.bf16.msra.mxu0 0
    %700 = vmatprep.subr.bf16.mxu0 %v115
    %701 = vmatpush1.bf16.msra.mxu0 %v112
    %702 = vmatprep.subr.bf16.mxu0 0
    %703 = vmatpush2.bf16.msra.mxu0 0
    %704 = vmatprep.subr.bf16.mxu0 0
    %705 = vmatpush2.bf16.msra.mxu0 0
    %706 = vmatprep.subr.bf16.mxu0 0
    %707 = vmatpush2.bf16.msra.mxu0 0
    %708 = vmatprep.subr.bf16.mxu0 0
    %709 = vmatpush2.bf16.msra.mxu0 0
    %710 = vmatprep.subr.bf16.mxu0 0
    %711 = vmatpush2.bf16.msra.mxu0 0
    %712 = vmatprep.subr.bf16.mxu0 0
    %713 = vmatpush2.bf16.msra.mxu0 0
    %714 = vmatprep.subr.bf16.mxu0 0
    %715 = vmatpush2.bf16.msra.mxu0 0
    %716 = vmatprep.subr.bf16.mxu0 0
    %717 = vmatpush2.bf16.msra.mxu0 0
    %718 = vmatprep.mubr.bf16.mxu0 0
    %719 = vmatmul.mubr.bf16.gmra.mxu0 %v684
    %v720 = vpop.f32.mrf.mxu0
    %v721 = vadd.f32 %v63, %v720
    %v722 = vpop.f32.mrf.mxu0
    %v723 = vadd.f32 %v67, %v722
    %v724 = vpop.f32.mrf.mxu0
    %v725 = vpop.f32.mrf.mxu0
    %726 = vdwg.mxu0
    %727 = vmatprep.subr.bf16.mxu0 0
    %728 = vmatpush1.bf16.msra.mxu0 0
    %729 = vmatprep.subr.bf16.mxu0 0
    %730 = vmatpush1.bf16.msra.mxu0 0
    %731 = vmatprep.subr.bf16.mxu0 0
    %732 = vmatpush1.bf16.msra.mxu0 0
    %733 = vmatprep.subr.bf16.mxu0 0
    %734 = vmatpush1.bf16.msra.mxu0 0
    %735 = vmatprep.subr.bf16.mxu0 0
    %736 = vmatpush1.bf16.msra.mxu0 0
    %737 = vmatprep.subr.bf16.mxu0 0
    %738 = vmatpush1.bf16.msra.mxu0 0
    %739 = vmatprep.subr.bf16.mxu0 0
    %740 = vmatpush1.bf16.msra.mxu0 0
    %741 = vmatprep.subr.bf16.mxu0 %v121
    %742 = vmatpush1.bf16.msra.mxu0 %v118
    %743 = vmatprep.subr.bf16.mxu0 0
    %744 = vmatpush2.bf16.msra.mxu0 0
    %745 = vmatprep.subr.bf16.mxu0 0
    %746 = vmatpush2.bf16.msra.mxu0 0
    %747 = vmatprep.subr.bf16.mxu0 0
    %748 = vmatpush2.bf16.msra.mxu0 0
    %749 = vmatprep.subr.bf16.mxu0 0
    %750 = vmatpush2.bf16.msra.mxu0 0
    %751 = vmatprep.subr.bf16.mxu0 0
    %752 = vmatpush2.bf16.msra.mxu0 0
    %753 = vmatprep.subr.bf16.mxu0 0
    %754 = vmatpush2.bf16.msra.mxu0 0
    %755 = vmatprep.subr.bf16.mxu0 0
    %756 = vmatpush2.bf16.msra.mxu0 0
    %757 = vmatprep.subr.bf16.mxu0 0
    %758 = vmatpush2.bf16.msra.mxu0 0
    %759 = vmatprep.mubr.bf16.mxu0 0
    %760 = vmatmul.mubr.bf16.gmra.mxu0 %v684
    %v761 = vpop.f32.mrf.mxu0
    %v762 = vadd.f32 %v71, %v761
    %v763 = vpop.f32.mrf.mxu0
    %v764 = vadd.f32 %v75, %v763
    %v765 = vpop.f32.mrf.mxu0
    %v766 = vpop.f32.mrf.mxu0
    %767 = vdwg.mxu0
    %v772 = vcombine.low %v721, %v723
    %v773 = vcombine.low %v762, %v764
    %v775 = vunpack.c.l.s4 1983009808
    %v776 = vunpack.c.0.s8 %v775
    %v777 = vlaneseq
    %v778 = vshrl.u32 %v777, 7
    %v779 = vsub.s32 %v776, %v778
    %v780 = vrot.slane %v772, %v779
    %v782 = vunpack.c.l.s4 1983009808
    %v783 = vunpack.c.0.s8 %v782
    %v784 = vlaneseq
    %v785 = vshrl.u32 %v784, 7
    %v786 = vsub.s32 %v783, %v785
    %v787 = vrot.slane %v773, %v786
    %v788 = vcombine.low %v780, %v787
    %s790 = scalar_lea.vmem [#allocation2], 40
    %791 = vst [vmem:[%s790] sm:$0xff] %v788
    %v792 = vrot.slane %v82, 6
    %v793 = vrot.slane %v83, 5
    %v794 = vsel %vm85, %v793, %v792
    %v795 = vpack.c.b16 %v794, %v794
    %v797 = vsel %vm106, %v795, 0
    %799 = vmatprep.subr.bf16.mxu0 0
    %800 = vmatpush1.bf16.msra.mxu0 0
    %801 = vmatprep.subr.bf16.mxu0 0
    %802 = vmatpush1.bf16.msra.mxu0 0
    %803 = vmatprep.subr.bf16.mxu0 0
    %804 = vmatpush1.bf16.msra.mxu0 0
    %805 = vmatprep.subr.bf16.mxu0 0
    %806 = vmatpush1.bf16.msra.mxu0 0
    %807 = vmatprep.subr.bf16.mxu0 0
    %808 = vmatpush1.bf16.msra.mxu0 0
    %809 = vmatprep.subr.bf16.mxu0 0
    %810 = vmatpush1.bf16.msra.mxu0 0
    %811 = vmatprep.subr.bf16.mxu0 0
    %812 = vmatpush1.bf16.msra.mxu0 0
    %813 = vmatprep.subr.bf16.mxu0 %v115
    %814 = vmatpush1.bf16.msra.mxu0 %v112
    %815 = vmatprep.subr.bf16.mxu0 0
    %816 = vmatpush2.bf16.msra.mxu0 0
    %817 = vmatprep.subr.bf16.mxu0 0
    %818 = vmatpush2.bf16.msra.mxu0 0
    %819 = vmatprep.subr.bf16.mxu0 0
    %820 = vmatpush2.bf16.msra.mxu0 0
    %821 = vmatprep.subr.bf16.mxu0 0
    %822 = vmatpush2.bf16.msra.mxu0 0
    %823 = vmatprep.subr.bf16.mxu0 0
    %824 = vmatpush2.bf16.msra.mxu0 0
    %825 = vmatprep.subr.bf16.mxu0 0
    %826 = vmatpush2.bf16.msra.mxu0 0
    %827 = vmatprep.subr.bf16.mxu0 0
    %828 = vmatpush2.bf16.msra.mxu0 0
    %829 = vmatprep.subr.bf16.mxu0 0
    %830 = vmatpush2.bf16.msra.mxu0 0
    %831 = vmatprep.mubr.bf16.mxu0 0
    %832 = vmatmul.mubr.bf16.gmra.mxu0 %v797
    %v833 = vpop.f32.mrf.mxu0
    %v834 = vadd.f32 %v63, %v833
    %v835 = vpop.f32.mrf.mxu0
    %v836 = vadd.f32 %v67, %v835
    %v837 = vpop.f32.mrf.mxu0
    %v838 = vpop.f32.mrf.mxu0
    %839 = vdwg.mxu0
    %840 = vmatprep.subr.bf16.mxu0 0
    %841 = vmatpush1.bf16.msra.mxu0 0
    %842 = vmatprep.subr.bf16.mxu0 0
    %843 = vmatpush1.bf16.msra.mxu0 0
    %844 = vmatprep.subr.bf16.mxu0 0
    %845 = vmatpush1.bf16.msra.mxu0 0
    %846 = vmatprep.subr.bf16.mxu0 0
    %847 = vmatpush1.bf16.msra.mxu0 0
    %848 = vmatprep.subr.bf16.mxu0 0
    %849 = vmatpush1.bf16.msra.mxu0 0
    %850 = vmatprep.subr.bf16.mxu0 0
    %851 = vmatpush1.bf16.msra.mxu0 0
    %852 = vmatprep.subr.bf16.mxu0 0
    %853 = vmatpush1.bf16.msra.mxu0 0
    %854 = vmatprep.subr.bf16.mxu0 %v121
    %855 = vmatpush1.bf16.msra.mxu0 %v118
    %856 = vmatprep.subr.bf16.mxu0 0
    %857 = vmatpush2.bf16.msra.mxu0 0
    %858 = vmatprep.subr.bf16.mxu0 0
    %859 = vmatpush2.bf16.msra.mxu0 0
    %860 = vmatprep.subr.bf16.mxu0 0
    %861 = vmatpush2.bf16.msra.mxu0 0
    %862 = vmatprep.subr.bf16.mxu0 0
    %863 = vmatpush2.bf16.msra.mxu0 0
    %864 = vmatprep.subr.bf16.mxu0 0
    %865 = vmatpush2.bf16.msra.mxu0 0
    %866 = vmatprep.subr.bf16.mxu0 0
    %867 = vmatpush2.bf16.msra.mxu0 0
    %868 = vmatprep.subr.bf16.mxu0 0
    %869 = vmatpush2.bf16.msra.mxu0 0
    %870 = vmatprep.subr.bf16.mxu0 0
    %871 = vmatpush2.bf16.msra.mxu0 0
    %872 = vmatprep.mubr.bf16.mxu0 0
    %873 = vmatmul.mubr.bf16.gmra.mxu0 %v797
    %v874 = vpop.f32.mrf.mxu0
    %v875 = vadd.f32 %v71, %v874
    %v876 = vpop.f32.mrf.mxu0
    %v877 = vadd.f32 %v75, %v876
    %v878 = vpop.f32.mrf.mxu0
    %v879 = vpop.f32.mrf.mxu0
    %880 = vdwg.mxu0
    %v885 = vcombine.low %v834, %v836
    %v886 = vcombine.low %v875, %v877
    %v888 = vunpack.c.l.s4 1983009808
    %v889 = vunpack.c.0.s8 %v888
    %v890 = vlaneseq
    %v891 = vshrl.u32 %v890, 7
    %v892 = vsub.s32 %v889, %v891
    %v893 = vrot.slane %v885, %v892
    %v895 = vunpack.c.l.s4 1983009808
    %v896 = vunpack.c.0.s8 %v895
    %v897 = vlaneseq
    %v898 = vshrl.u32 %v897, 7
    %v899 = vsub.s32 %v896, %v898
    %v900 = vrot.slane %v886, %v899
    %v901 = vcombine.low %v893, %v900
    %s903 = scalar_lea.vmem [#allocation2], 48
    %904 = vst [vmem:[%s903] sm:$0xff] %v901
    %v905 = vrot.slane %v82, 7
    %v906 = vrot.slane %v83, 6
    %v907 = vsel %vm85, %v906, %v905
    %v908 = vpack.c.b16 %v907, %v907
    %v910 = vsel %vm106, %v908, 0
    %912 = vmatprep.subr.bf16.mxu0 0
    %913 = vmatpush1.bf16.msra.mxu0 0
    %914 = vmatprep.subr.bf16.mxu0 0
    %915 = vmatpush1.bf16.msra.mxu0 0
    %916 = vmatprep.subr.bf16.mxu0 0
    %917 = vmatpush1.bf16.msra.mxu0 0
    %918 = vmatprep.subr.bf16.mxu0 0
    %919 = vmatpush1.bf16.msra.mxu0 0
    %920 = vmatprep.subr.bf16.mxu0 0
    %921 = vmatpush1.bf16.msra.mxu0 0
    %922 = vmatprep.subr.bf16.mxu0 0
    %923 = vmatpush1.bf16.msra.mxu0 0
    %924 = vmatprep.subr.bf16.mxu0 0
    %925 = vmatpush1.bf16.msra.mxu0 0
    %926 = vmatprep.subr.bf16.mxu0 %v115
    %927 = vmatpush1.bf16.msra.mxu0 %v112
    %928 = vmatprep.subr.bf16.mxu0 0
    %929 = vmatpush2.bf16.msra.mxu0 0
    %930 = vmatprep.subr.bf16.mxu0 0
    %931 = vmatpush2.bf16.msra.mxu0 0
    %932 = vmatprep.subr.bf16.mxu0 0
    %933 = vmatpush2.bf16.msra.mxu0 0
    %934 = vmatprep.subr.bf16.mxu0 0
    %935 = vmatpush2.bf16.msra.mxu0 0
    %936 = vmatprep.subr.bf16.mxu0 0
    %937 = vmatpush2.bf16.msra.mxu0 0
    %938 = vmatprep.subr.bf16.mxu0 0
    %939 = vmatpush2.bf16.msra.mxu0 0
    %940 = vmatprep.subr.bf16.mxu0 0
    %941 = vmatpush2.bf16.msra.mxu0 0
    %942 = vmatprep.subr.bf16.mxu0 0
    %943 = vmatpush2.bf16.msra.mxu0 0
    %944 = vmatprep.mubr.bf16.mxu0 0
    %945 = vmatmul.mubr.bf16.gmra.mxu0 %v910
    %v946 = vpop.f32.mrf.mxu0
    %v947 = vadd.f32 %v63, %v946
    %v948 = vpop.f32.mrf.mxu0
    %v949 = vadd.f32 %v67, %v948
    %v950 = vpop.f32.mrf.mxu0
    %v951 = vpop.f32.mrf.mxu0
    %952 = vdwg.mxu0
    %953 = vmatprep.subr.bf16.mxu0 0
    %954 = vmatpush1.bf16.msra.mxu0 0
    %955 = vmatprep.subr.bf16.mxu0 0
    %956 = vmatpush1.bf16.msra.mxu0 0
    %957 = vmatprep.subr.bf16.mxu0 0
    %958 = vmatpush1.bf16.msra.mxu0 0
    %959 = vmatprep.subr.bf16.mxu0 0
    %960 = vmatpush1.bf16.msra.mxu0 0
    %961 = vmatprep.subr.bf16.mxu0 0
    %962 = vmatpush1.bf16.msra.mxu0 0
    %963 = vmatprep.subr.bf16.mxu0 0
    %964 = vmatpush1.bf16.msra.mxu0 0
    %965 = vmatprep.subr.bf16.mxu0 0
    %966 = vmatpush1.bf16.msra.mxu0 0
    %967 = vmatprep.subr.bf16.mxu0 %v121
    %968 = vmatpush1.bf16.msra.mxu0 %v118
    %969 = vmatprep.subr.bf16.mxu0 0
    %970 = vmatpush2.bf16.msra.mxu0 0
    %971 = vmatprep.subr.bf16.mxu0 0
    %972 = vmatpush2.bf16.msra.mxu0 0
    %973 = vmatprep.subr.bf16.mxu0 0
    %974 = vmatpush2.bf16.msra.mxu0 0
    %975 = vmatprep.subr.bf16.mxu0 0
    %976 = vmatpush2.bf16.msra.mxu0 0
    %977 = vmatprep.subr.bf16.mxu0 0
    %978 = vmatpush2.bf16.msra.mxu0 0
    %979 = vmatprep.subr.bf16.mxu0 0
    %980 = vmatpush2.bf16.msra.mxu0 0
    %981 = vmatprep.subr.bf16.mxu0 0
    %982 = vmatpush2.bf16.msra.mxu0 0
    %983 = vmatprep.subr.bf16.mxu0 0
    %984 = vmatpush2.bf16.msra.mxu0 0
    %985 = vmatprep.mubr.bf16.mxu0 0
    %986 = vmatmul.mubr.bf16.gmra.mxu0 %v910
    %v987 = vpop.f32.mrf.mxu0
    %v988 = vadd.f32 %v71, %v987
    %v989 = vpop.f32.mrf.mxu0
    %v990 = vadd.f32 %v75, %v989
    %v991 = vpop.f32.mrf.mxu0
    %v992 = vpop.f32.mrf.mxu0
    %993 = vdwg.mxu0
    %v998 = vcombine.low %v947, %v949
    %v999 = vcombine.low %v988, %v990
    %v1001 = vunpack.c.l.s4 1983009808
    %v1002 = vunpack.c.0.s8 %v1001
    %v1003 = vlaneseq
    %v1004 = vshrl.u32 %v1003, 7
    %v1005 = vsub.s32 %v1002, %v1004
    %v1006 = vrot.slane %v998, %v1005
    %v1008 = vunpack.c.l.s4 1983009808
    %v1009 = vunpack.c.0.s8 %v1008
    %v1010 = vlaneseq
    %v1011 = vshrl.u32 %v1010, 7
    %v1012 = vsub.s32 %v1009, %v1011
    %v1013 = vrot.slane %v999, %v1012
    %v1014 = vcombine.low %v1006, %v1013
    %s1016 = scalar_lea.vmem [#allocation2], 56
    %1017 = vst [vmem:[%s1016] sm:$0xff] %v1014
    %v1018 = vld [vmem:[#allocation3] sm:$0xff]
    %v1019 = vld [vmem:[#allocation3 + $0x8] sm:$0xff]
    %v1020 = vld [vmem:[#allocation3 + $0x10] sm:$0xff]
    %v1021 = vld [vmem:[#allocation3 + $0x18] sm:$0xff]
    %v1022 = vld [vmem:[#allocation3 + $0x20] sm:$0xff]
    %v1023 = vld [vmem:[#allocation3 + $0x28] sm:$0xff]
    %v1024 = vld [vmem:[#allocation3 + $0x30] sm:$0xff]
    %v1025 = vld [vmem:[#allocation3 + $0x38] sm:$0xff]
    %v1026 = vld [vmem:[#allocation3 + $0x40] sm:$0xff]
    %v1027 = vld [vmem:[#allocation3 + $0x48] sm:$0xff]
    %v1028 = vld [vmem:[#allocation3 + $0x50] sm:$0xff]
    %v1029 = vld [vmem:[#allocation3 + $0x58] sm:$0xff]
    %v1030 = vld [vmem:[#allocation3 + $0x60] sm:$0xff]
    %v1031 = vld [vmem:[#allocation3 + $0x68] sm:$0xff]
    %v1032 = vld [vmem:[#allocation3 + $0x70] sm:$0xff]
    %v1033 = vld [vmem:[#allocation3 + $0x78] sm:$0xff]
    %v1034 = vld [vmem:[#allocation3 + $0x80] sm:$0xff]
    %v1035 = vld [vmem:[#allocation3 + $0x88] sm:$0xff]
    %v1036 = vld [vmem:[#allocation3 + $0x90] sm:$0xff]
    %v1037 = vld [vmem:[#allocation3 + $0x98] sm:$0xff]
    %v1038 = vld [vmem:[#allocation3 + $0xa0] sm:$0xff]
    %v1039 = vld [vmem:[#allocation3 + $0xa8] sm:$0xff]
    %v1040 = vld [vmem:[#allocation3 + $0xb0] sm:$0xff]
    %v1041 = vld [vmem:[#allocation3 + $0xb8] sm:$0xff]
    %v1042 = vld [vmem:[#allocation3 + $0xc0] sm:$0xff]
    %v1043 = vld [vmem:[#allocation3 + $0xc8] sm:$0xff]
    %v1044 = vld [vmem:[#allocation3 + $0xd0] sm:$0xff]
    %v1045 = vld [vmem:[#allocation3 + $0xd8] sm:$0xff]
    %v1046 = vld [vmem:[#allocation3 + $0xe0] sm:$0xff]
    %v1047 = vld [vmem:[#allocation3 + $0xe8] sm:$0xff]
    %v1048 = vld [vmem:[#allocation3 + $0xf0] sm:$0xff]
    %v1049 = vld [vmem:[#allocation3 + $0xf8] sm:$0xff]
    %v1050 = vld [vmem:[#allocation2] sm:$0xff]
    %v1083 = vunpack.c.l.b16 %v1018
    %v1084 = vunpack.c.h.b16 %v1018
    %v1085 = vunpack.c.l.b16 %v1019
    %v1086 = vunpack.c.h.b16 %v1019
    %v1087 = vunpack.c.l.b16 %v1020
    %v1088 = vunpack.c.h.b16 %v1020
    %v1089 = vunpack.c.l.b16 %v1021
    %v1090 = vunpack.c.h.b16 %v1021
    %v1091 = vunpack.c.l.b16 %v1022
    %v1092 = vunpack.c.h.b16 %v1022
    %v1093 = vunpack.c.l.b16 %v1023
    %v1094 = vunpack.c.h.b16 %v1023
    %v1095 = vunpack.c.l.b16 %v1024
    %v1096 = vunpack.c.h.b16 %v1024
    %v1097 = vunpack.c.l.b16 %v1025
    %v1098 = vunpack.c.h.b16 %v1025
    %v1099 = vunpack.c.l.b16 %v1026
    %v1100 = vunpack.c.h.b16 %v1026
    %v1101 = vunpack.c.l.b16 %v1027
    %v1102 = vunpack.c.h.b16 %v1027
    %v1103 = vunpack.c.l.b16 %v1028
    %v1104 = vunpack.c.h.b16 %v1028
    %v1105 = vunpack.c.l.b16 %v1029
    %v1106 = vunpack.c.h.b16 %v1029
    %v1107 = vunpack.c.l.b16 %v1030
    %v1108 = vunpack.c.h.b16 %v1030
    %v1109 = vunpack.c.l.b16 %v1031
    %v1110 = vunpack.c.h.b16 %v1031
    %v1111 = vunpack.c.l.b16 %v1032
    %v1112 = vunpack.c.h.b16 %v1032
    %v1113 = vunpack.c.l.b16 %v1033
    %v1114 = vunpack.c.h.b16 %v1033
    %v1115 = vunpack.c.l.b16 %v1034
    %v1116 = vunpack.c.h.b16 %v1034
    %v1117 = vunpack.c.l.b16 %v1035
    %v1118 = vunpack.c.h.b16 %v1035
    %v1119 = vunpack.c.l.b16 %v1036
    %v1120 = vunpack.c.h.b16 %v1036
    %v1121 = vunpack.c.l.b16 %v1037
    %v1122 = vunpack.c.h.b16 %v1037
    %v1123 = vunpack.c.l.b16 %v1038
    %v1124 = vunpack.c.h.b16 %v1038
    %v1125 = vunpack.c.l.b16 %v1039
    %v1126 = vunpack.c.h.b16 %v1039
    %v1127 = vunpack.c.l.b16 %v1040
    %v1128 = vunpack.c.h.b16 %v1040
    %v1129 = vunpack.c.l.b16 %v1041
    %v1130 = vunpack.c.h.b16 %v1041
    %v1131 = vunpack.c.l.b16 %v1042
    %v1132 = vunpack.c.h.b16 %v1042
    %v1133 = vunpack.c.l.b16 %v1043
    %v1134 = vunpack.c.h.b16 %v1043
    %v1135 = vunpack.c.l.b16 %v1044
    %v1136 = vunpack.c.h.b16 %v1044
    %v1137 = vunpack.c.l.b16 %v1045
    %v1138 = vunpack.c.h.b16 %v1045
    %v1139 = vunpack.c.l.b16 %v1046
    %v1140 = vunpack.c.h.b16 %v1046
    %v1141 = vunpack.c.l.b16 %v1047
    %v1142 = vunpack.c.h.b16 %v1047
    %v1143 = vunpack.c.l.b16 %v1048
    %v1144 = vunpack.c.h.b16 %v1048
    %v1145 = vunpack.c.l.b16 %v1049
    %v1146 = vunpack.c.h.b16 %v1049
    %v1147 = vpack.c.b16 %v1087, %v1083
    %v1148 = vpack.c.b16 %v1088, %v1084
    %v1149 = vpack.c.b16 %v1089, %v1085
    %v1150 = vpack.c.b16 %v1090, %v1086
    %v1151 = vpack.c.b16 %v1095, %v1091
    %v1152 = vpack.c.b16 %v1096, %v1092
    %v1153 = vpack.c.b16 %v1097, %v1093
    %v1154 = vpack.c.b16 %v1098, %v1094
    %v1155 = vpack.c.b16 %v1103, %v1099
    %v1156 = vpack.c.b16 %v1104, %v1100
    %v1157 = vpack.c.b16 %v1105, %v1101
    %v1158 = vpack.c.b16 %v1106, %v1102
    %v1159 = vpack.c.b16 %v1111, %v1107
    %v1160 = vpack.c.b16 %v1112, %v1108
    %v1161 = vpack.c.b16 %v1113, %v1109
    %v1162 = vpack.c.b16 %v1114, %v1110
    %v1163 = vpack.c.b16 %v1119, %v1115
    %v1164 = vpack.c.b16 %v1120, %v1116
    %v1165 = vpack.c.b16 %v1121, %v1117
    %v1166 = vpack.c.b16 %v1122, %v1118
    %v1167 = vpack.c.b16 %v1127, %v1123
    %v1168 = vpack.c.b16 %v1128, %v1124
    %v1169 = vpack.c.b16 %v1129, %v1125
    %v1170 = vpack.c.b16 %v1130, %v1126
    %v1171 = vpack.c.b16 %v1135, %v1131
    %v1172 = vpack.c.b16 %v1136, %v1132
    %v1173 = vpack.c.b16 %v1137, %v1133
    %v1174 = vpack.c.b16 %v1138, %v1134
    %v1175 = vpack.c.b16 %v1143, %v1139
    %v1176 = vpack.c.b16 %v1144, %v1140
    %v1177 = vpack.c.b16 %v1145, %v1141
    %v1178 = vpack.c.b16 %v1146, %v1142
    %1211 = vmatprep.subr.bf16.mxu0 %v1176
    %1212 = vmatpush1.bf16.msra.mxu0 %v1175
    %1213 = vmatprep.subr.bf16.mxu0 %v1172
    %1214 = vmatpush1.bf16.msra.mxu0 %v1171
    %1215 = vmatprep.subr.bf16.mxu0 %v1168
    %1216 = vmatpush1.bf16.msra.mxu0 %v1167
    %1217 = vmatprep.subr.bf16.mxu0 %v1164
    %1218 = vmatpush1.bf16.msra.mxu0 %v1163
    %1219 = vmatprep.subr.bf16.mxu0 %v1160
    %1220 = vmatpush1.bf16.msra.mxu0 %v1159
    %1221 = vmatprep.subr.bf16.mxu0 %v1156
    %1222 = vmatpush1.bf16.msra.mxu0 %v1155
    %1223 = vmatprep.subr.bf16.mxu0 %v1152
    %1224 = vmatpush1.bf16.msra.mxu0 %v1151
    %1225 = vmatprep.subr.bf16.mxu0 %v1148
    %1226 = vmatpush1.bf16.msra.mxu0 %v1147
    %1227 = vmatprep.subr.bf16.mxu0 0
    %1228 = vmatpush2.bf16.msra.mxu0 0
    %1229 = vmatprep.subr.bf16.mxu0 0
    %1230 = vmatpush2.bf16.msra.mxu0 0
    %1231 = vmatprep.subr.bf16.mxu0 0
    %1232 = vmatpush2.bf16.msra.mxu0 0
    %1233 = vmatprep.subr.bf16.mxu0 0
    %1234 = vmatpush2.bf16.msra.mxu0 0
    %1235 = vmatprep.subr.bf16.mxu0 0
    %1236 = vmatpush2.bf16.msra.mxu0 0
    %1237 = vmatprep.subr.bf16.mxu0 0
    %1238 = vmatpush2.bf16.msra.mxu0 0
    %1239 = vmatprep.subr.bf16.mxu0 0
    %1240 = vmatpush2.bf16.msra.mxu0 0
    %1241 = vmatprep.subr.bf16.mxu0 0
    %1242 = vmatpush2.bf16.msra.mxu0 0
    %1243 = vmatprep.mubr.bf16.mxu0 0
    %1244 = vmatmul.mubr.bf16.gmra.mxu0 0
    %v1245 = vpop.f32.mrf.mxu0
    %v1246 = vadd.f32 0.0, %v1245
    %v1247 = vpop.f32.mrf.mxu0
    %v1248 = vadd.f32 0.0, %v1247
    %v1249 = vpop.f32.mrf.mxu0
    %v1250 = vpop.f32.mrf.mxu0
    %1251 = vdwg.mxu0
    %1252 = vmatprep.subr.bf16.mxu0 %v1178
    %1253 = vmatpush1.bf16.msra.mxu0 %v1177
    %1254 = vmatprep.subr.bf16.mxu0 %v1174
    %1255 = vmatpush1.bf16.msra.mxu0 %v1173
    %1256 = vmatprep.subr.bf16.mxu0 %v1170
    %1257 = vmatpush1.bf16.msra.mxu0 %v1169
    %1258 = vmatprep.subr.bf16.mxu0 %v1166
    %1259 = vmatpush1.bf16.msra.mxu0 %v1165
    %1260 = vmatprep.subr.bf16.mxu0 %v1162
    %1261 = vmatpush1.bf16.msra.mxu0 %v1161
    %1262 = vmatprep.subr.bf16.mxu0 %v1158
    %1263 = vmatpush1.bf16.msra.mxu0 %v1157
    %1264 = vmatprep.subr.bf16.mxu0 %v1154
    %1265 = vmatpush1.bf16.msra.mxu0 %v1153
    %1266 = vmatprep.subr.bf16.mxu0 %v1150
    %1267 = vmatpush1.bf16.msra.mxu0 %v1149
    %1268 = vmatprep.subr.bf16.mxu0 0
    %1269 = vmatpush2.bf16.msra.mxu0 0
    %1270 = vmatprep.subr.bf16.mxu0 0
    %1271 = vmatpush2.bf16.msra.mxu0 0
    %1272 = vmatprep.subr.bf16.mxu0 0
    %1273 = vmatpush2.bf16.msra.mxu0 0
    %1274 = vmatprep.subr.bf16.mxu0 0
    %1275 = vmatpush2.bf16.msra.mxu0 0
    %1276 = vmatprep.subr.bf16.mxu0 0
    %1277 = vmatpush2.bf16.msra.mxu0 0
    %1278 = vmatprep.subr.bf16.mxu0 0
    %1279 = vmatpush2.bf16.msra.mxu0 0
    %1280 = vmatprep.subr.bf16.mxu0 0
    %1281 = vmatpush2.bf16.msra.mxu0 0
    %1282 = vmatprep.subr.bf16.mxu0 0
    %1283 = vmatpush2.bf16.msra.mxu0 0
    %1284 = vmatprep.mubr.bf16.mxu0 0
    %1285 = vmatmul.mubr.bf16.gmra.mxu0 0
    %v1286 = vpop.f32.mrf.mxu0
    %v1287 = vadd.f32 0.0, %v1286
    %v1288 = vpop.f32.mrf.mxu0
    %v1289 = vadd.f32 0.0, %v1288
    %v1290 = vpop.f32.mrf.mxu0
    %v1291 = vpop.f32.mrf.mxu0
    %1292 = vdwg.mxu0
    %v1297 = vcombine.low %v1246, %v1248
    %v1298 = vcombine.low %v1287, %v1289
    %v1300 = vunpack.c.l.s4 1983009808
    %v1301 = vunpack.c.0.s8 %v1300
    %v1302 = vlaneseq
    %v1303 = vshrl.u32 %v1302, 7
    %v1304 = vsub.s32 %v1301, %v1303
    %v1305 = vrot.slane %v1297, %v1304
    %v1307 = vunpack.c.l.s4 1983009808
    %v1308 = vunpack.c.0.s8 %v1307
    %v1309 = vlaneseq
    %v1310 = vshrl.u32 %v1309, 7
    %v1311 = vsub.s32 %v1308, %v1310
    %v1312 = vrot.slane %v1298, %v1311
    %v1313 = vcombine.low %v1305, %v1312
    %v1315 = vadd.f32 %v1050, %v1313
    %v1316 = vxor.u32 %v1315, 2147483648
    %v1317 = vmul.f32 %v1316, 1.442695
    %v1318 = vpow.pop %v1317
    %v1319 = vadd.f32 %v1318, 1.0
    %v1320 = vrcp.pop %v1319
    %v1321 = vmul.f32 1.0, %v1320
    %v1323 = vrot.slane %v1315, 2
    %v1325 = vxor.u32 %v1323, 2147483648
    %v1326 = vmul.f32 %v1325, 1.442695
    %v1327 = vpow.pop %v1326
    %v1328 = vadd.f32 %v1327, 1.0
    %v1329 = vrcp.pop %v1328
    %v1330 = vmul.f32 1.0, %v1329
    %v1331 = vrot.slane %v1315, 4
    %v1333 = vtanh.pop %v1331
    %v1334 = vrot.slane %v1315, 6
    %v1336 = vxor.u32 %v1334, 2147483648
    %v1337 = vmul.f32 %v1336, 1.442695
    %v1338 = vpow.pop %v1337
    %v1339 = vadd.f32 %v1338, 1.0
    %v1340 = vrcp.pop %v1339
    %v1341 = vmul.f32 1.0, %v1340
    %v1342 = vmul.f32 %v1330, 0.0
    %v1343 = vmul.f32 %v1321, %v1333
    %v1344 = vadd.f32 %v1342, %v1343
    %v1345 = vtanh.pop %v1344
    %v1346 = vmul.f32 %v1341, %v1345
    %v1347 = vld [vmem:[%s338] sm:$0xff]
    %v1348 = vpack.c.bf16 %v1346, %v1346
    %1349 = vmatprep.subr.bf16.mxu0 %v1176
    %1350 = vmatpush1.bf16.msra.mxu0 %v1175
    %1351 = vmatprep.subr.bf16.mxu0 %v1172
    %1352 = vmatpush1.bf16.msra.mxu0 %v1171
    %1353 = vmatprep.subr.bf16.mxu0 %v1168
    %1354 = vmatpush1.bf16.msra.mxu0 %v1167
    %1355 = vmatprep.subr.bf16.mxu0 %v1164
    %1356 = vmatpush1.bf16.msra.mxu0 %v1163
    %1357 = vmatprep.subr.bf16.mxu0 %v1160
    %1358 = vmatpush1.bf16.msra.mxu0 %v1159
    %1359 = vmatprep.subr.bf16.mxu0 %v1156
    %1360 = vmatpush1.bf16.msra.mxu0 %v1155
    %1361 = vmatprep.subr.bf16.mxu0 %v1152
    %1362 = vmatpush1.bf16.msra.mxu0 %v1151
    %1363 = vmatprep.subr.bf16.mxu0 %v1148
    %1364 = vmatpush1.bf16.msra.mxu0 %v1147
    %1365 = vmatprep.subr.bf16.mxu0 0
    %1366 = vmatpush2.bf16.msra.mxu0 0
    %1367 = vmatprep.subr.bf16.mxu0 0
    %1368 = vmatpush2.bf16.msra.mxu0 0
    %1369 = vmatprep.subr.bf16.mxu0 0
    %1370 = vmatpush2.bf16.msra.mxu0 0
    %1371 = vmatprep.subr.bf16.mxu0 0
    %1372 = vmatpush2.bf16.msra.mxu0 0
    %1373 = vmatprep.subr.bf16.mxu0 0
    %1374 = vmatpush2.bf16.msra.mxu0 0
    %1375 = vmatprep.subr.bf16.mxu0 0
    %1376 = vmatpush2.bf16.msra.mxu0 0
    %1377 = vmatprep.subr.bf16.mxu0 0
    %1378 = vmatpush2.bf16.msra.mxu0 0
    %1379 = vmatprep.subr.bf16.mxu0 0
    %1380 = vmatpush2.bf16.msra.mxu0 0
    %1381 = vmatprep.mubr.bf16.mxu0 0
    %1382 = vmatmul.mubr.bf16.gmra.mxu0 %v1348
    %v1383 = vpop.f32.mrf.mxu0
    %v1384 = vadd.f32 0.0, %v1383
    %v1385 = vpop.f32.mrf.mxu0
    %v1386 = vadd.f32 0.0, %v1385
    %v1387 = vpop.f32.mrf.mxu0
    %v1388 = vpop.f32.mrf.mxu0
    %1389 = vdwg.mxu0
    %1390 = vmatprep.subr.bf16.mxu0 %v1178
    %1391 = vmatpush1.bf16.msra.mxu0 %v1177
    %1392 = vmatprep.subr.bf16.mxu0 %v1174
    %1393 = vmatpush1.bf16.msra.mxu0 %v1173
    %1394 = vmatprep.subr.bf16.mxu0 %v1170
    %1395 = vmatpush1.bf16.msra.mxu0 %v1169
    %1396 = vmatprep.subr.bf16.mxu0 %v1166
    %1397 = vmatpush1.bf16.msra.mxu0 %v1165
    %1398 = vmatprep.subr.bf16.mxu0 %v1162
    %1399 = vmatpush1.bf16.msra.mxu0 %v1161
    %1400 = vmatprep.subr.bf16.mxu0 %v1158
    %1401 = vmatpush1.bf16.msra.mxu0 %v1157
    %1402 = vmatprep.subr.bf16.mxu0 %v1154
    %1403 = vmatpush1.bf16.msra.mxu0 %v1153
    %1404 = vmatprep.subr.bf16.mxu0 %v1150
    %1405 = vmatpush1.bf16.msra.mxu0 %v1149
    %1406 = vmatprep.subr.bf16.mxu0 0
    %1407 = vmatpush2.bf16.msra.mxu0 0
    %1408 = vmatprep.subr.bf16.mxu0 0
    %1409 = vmatpush2.bf16.msra.mxu0 0
    %1410 = vmatprep.subr.bf16.mxu0 0
    %1411 = vmatpush2.bf16.msra.mxu0 0
    %1412 = vmatprep.subr.bf16.mxu0 0
    %1413 = vmatpush2.bf16.msra.mxu0 0
    %1414 = vmatprep.subr.bf16.mxu0 0
    %1415 = vmatpush2.bf16.msra.mxu0 0
    %1416 = vmatprep.subr.bf16.mxu0 0
    %1417 = vmatpush2.bf16.msra.mxu0 0
    %1418 = vmatprep.subr.bf16.mxu0 0
    %1419 = vmatpush2.bf16.msra.mxu0 0
    %1420 = vmatprep.subr.bf16.mxu0 0
    %1421 = vmatpush2.bf16.msra.mxu0 0
    %1422 = vmatprep.mubr.bf16.mxu0 0
    %1423 = vmatmul.mubr.bf16.gmra.mxu0 %v1348
    %v1424 = vpop.f32.mrf.mxu0
    %v1425 = vadd.f32 0.0, %v1424
    %v1426 = vpop.f32.mrf.mxu0
    %v1427 = vadd.f32 0.0, %v1426
    %v1428 = vpop.f32.mrf.mxu0
    %v1429 = vpop.f32.mrf.mxu0
    %1430 = vdwg.mxu0
    %v1435 = vcombine.low %v1384, %v1386
    %v1436 = vcombine.low %v1425, %v1427
    %v1438 = vunpack.c.l.s4 1983009808
    %v1439 = vunpack.c.0.s8 %v1438
    %v1440 = vlaneseq
    %v1441 = vshrl.u32 %v1440, 7
    %v1442 = vsub.s32 %v1439, %v1441
    %v1443 = vrot.slane %v1435, %v1442
    %v1445 = vunpack.c.l.s4 1983009808
    %v1446 = vunpack.c.0.s8 %v1445
    %v1447 = vlaneseq
    %v1448 = vshrl.u32 %v1447, 7
    %v1449 = vsub.s32 %v1446, %v1448
    %v1450 = vrot.slane %v1436, %v1449
    %v1451 = vcombine.low %v1443, %v1450
    %v1453 = vadd.f32 %v1347, %v1451
    %v1454 = vxor.u32 %v1453, 2147483648
    %v1455 = vmul.f32 %v1454, 1.442695
    %v1456 = vpow.pop %v1455
    %v1457 = vadd.f32 %v1456, 1.0
    %v1458 = vrcp.pop %v1457
    %v1459 = vmul.f32 1.0, %v1458
    %v1461 = vrot.slane %v1453, 2
    %v1463 = vxor.u32 %v1461, 2147483648
    %v1464 = vmul.f32 %v1463, 1.442695
    %v1465 = vpow.pop %v1464
    %v1466 = vadd.f32 %v1465, 1.0
    %v1467 = vrcp.pop %v1466
    %v1468 = vmul.f32 1.0, %v1467
    %v1469 = vrot.slane %v1453, 4
    %v1471 = vtanh.pop %v1469
    %v1472 = vrot.slane %v1453, 6
    %v1474 = vxor.u32 %v1472, 2147483648
    %v1475 = vmul.f32 %v1474, 1.442695
    %v1476 = vpow.pop %v1475
    %v1477 = vadd.f32 %v1476, 1.0
    %v1478 = vrcp.pop %v1477
    %v1479 = vmul.f32 1.0, %v1478
    %v1480 = vmul.f32 %v1468, %v1344
    %v1481 = vmul.f32 %v1459, %v1471
    %v1482 = vadd.f32 %v1480, %v1481
    %v1483 = vtanh.pop %v1482
    %v1484 = vmul.f32 %v1479, %v1483
    %v1485 = vld [vmem:[%s451] sm:$0xff]
    %v1486 = vpack.c.bf16 %v1484, %v1484
    %1487 = vmatprep.subr.bf16.mxu0 %v1176
    %1488 = vmatpush1.bf16.msra.mxu0 %v1175
    %1489 = vmatprep.subr.bf16.mxu0 %v1172
    %1490 = vmatpush1.bf16.msra.mxu0 %v1171
    %1491 = vmatprep.subr.bf16.mxu0 %v1168
    %1492 = vmatpush1.bf16.msra.mxu0 %v1167
    %1493 = vmatprep.subr.bf16.mxu0 %v1164
    %1494 = vmatpush1.bf16.msra.mxu0 %v1163
    %1495 = vmatprep.subr.bf16.mxu0 %v1160
    %1496 = vmatpush1.bf16.msra.mxu0 %v1159
    %1497 = vmatprep.subr.bf16.mxu0 %v1156
    %1498 = vmatpush1.bf16.msra.mxu0 %v1155
    %1499 = vmatprep.subr.bf16.mxu0 %v1152
    %1500 = vmatpush1.bf16.msra.mxu0 %v1151
    %1501 = vmatprep.subr.bf16.mxu0 %v1148
    %1502 = vmatpush1.bf16.msra.mxu0 %v1147
    %1503 = vmatprep.subr.bf16.mxu0 0
    %1504 = vmatpush2.bf16.msra.mxu0 0
    %1505 = vmatprep.subr.bf16.mxu0 0
    %1506 = vmatpush2.bf16.msra.mxu0 0
    %1507 = vmatprep.subr.bf16.mxu0 0
    %1508 = vmatpush2.bf16.msra.mxu0 0
    %1509 = vmatprep.subr.bf16.mxu0 0
    %1510 = vmatpush2.bf16.msra.mxu0 0
    %1511 = vmatprep.subr.bf16.mxu0 0
    %1512 = vmatpush2.bf16.msra.mxu0 0
    %1513 = vmatprep.subr.bf16.mxu0 0
    %1514 = vmatpush2.bf16.msra.mxu0 0
    %1515 = vmatprep.subr.bf16.mxu0 0
    %1516 = vmatpush2.bf16.msra.mxu0 0
    %1517 = vmatprep.subr.bf16.mxu0 0
    %1518 = vmatpush2.bf16.msra.mxu0 0
    %1519 = vmatprep.mubr.bf16.mxu0 0
    %1520 = vmatmul.mubr.bf16.gmra.mxu0 %v1486
    %v1521 = vpop.f32.mrf.mxu0
    %v1522 = vadd.f32 0.0, %v1521
    %v1523 = vpop.f32.mrf.mxu0
    %v1524 = vadd.f32 0.0, %v1523
    %v1525 = vpop.f32.mrf.mxu0
    %v1526 = vpop.f32.mrf.mxu0
    %1527 = vdwg.mxu0
    %1528 = vmatprep.subr.bf16.mxu0 %v1178
    %1529 = vmatpush1.bf16.msra.mxu0 %v1177
    %1530 = vmatprep.subr.bf16.mxu0 %v1174
    %1531 = vmatpush1.bf16.msra.mxu0 %v1173
    %1532 = vmatprep.subr.bf16.mxu0 %v1170
    %1533 = vmatpush1.bf16.msra.mxu0 %v1169
    %1534 = vmatprep.subr.bf16.mxu0 %v1166
    %1535 = vmatpush1.bf16.msra.mxu0 %v1165
    %1536 = vmatprep.subr.bf16.mxu0 %v1162
    %1537 = vmatpush1.bf16.msra.mxu0 %v1161
    %1538 = vmatprep.subr.bf16.mxu0 %v1158
    %1539 = vmatpush1.bf16.msra.mxu0 %v1157
    %1540 = vmatprep.subr.bf16.mxu0 %v1154
    %1541 = vmatpush1.bf16.msra.mxu0 %v1153
    %1542 = vmatprep.subr.bf16.mxu0 %v1150
    %1543 = vmatpush1.bf16.msra.mxu0 %v1149
    %1544 = vmatprep.subr.bf16.mxu0 0
    %1545 = vmatpush2.bf16.msra.mxu0 0
    %1546 = vmatprep.subr.bf16.mxu0 0
    %1547 = vmatpush2.bf16.msra.mxu0 0
    %1548 = vmatprep.subr.bf16.mxu0 0
    %1549 = vmatpush2.bf16.msra.mxu0 0
    %1550 = vmatprep.subr.bf16.mxu0 0
    %1551 = vmatpush2.bf16.msra.mxu0 0
    %1552 = vmatprep.subr.bf16.mxu0 0
    %1553 = vmatpush2.bf16.msra.mxu0 0
    %1554 = vmatprep.subr.bf16.mxu0 0
    %1555 = vmatpush2.bf16.msra.mxu0 0
    %1556 = vmatprep.subr.bf16.mxu0 0
    %1557 = vmatpush2.bf16.msra.mxu0 0
    %1558 = vmatprep.subr.bf16.mxu0 0
    %1559 = vmatpush2.bf16.msra.mxu0 0
    %1560 = vmatprep.mubr.bf16.mxu0 0
    %1561 = vmatmul.mubr.bf16.gmra.mxu0 %v1486
    %v1562 = vpop.f32.mrf.mxu0
    %v1563 = vadd.f32 0.0, %v1562
    %v1564 = vpop.f32.mrf.mxu0
    %v1565 = vadd.f32 0.0, %v1564
    %v1566 = vpop.f32.mrf.mxu0
    %v1567 = vpop.f32.mrf.mxu0
    %1568 = vdwg.mxu0
    %v1573 = vcombine.low %v1522, %v1524
    %v1574 = vcombine.low %v1563, %v1565
    %v1576 = vunpack.c.l.s4 1983009808
    %v1577 = vunpack.c.0.s8 %v1576
    %v1578 = vlaneseq
    %v1579 = vshrl.u32 %v1578, 7
    %v1580 = vsub.s32 %v1577, %v1579
    %v1581 = vrot.slane %v1573, %v1580
    %v1583 = vunpack.c.l.s4 1983009808
    %v1584 = vunpack.c.0.s8 %v1583
    %v1585 = vlaneseq
    %v1586 = vshrl.u32 %v1585, 7
    %v1587 = vsub.s32 %v1584, %v1586
    %v1588 = vrot.slane %v1574, %v1587
    %v1589 = vcombine.low %v1581, %v1588
    %v1591 = vadd.f32 %v1485, %v1589
    %v1592 = vxor.u32 %v1591, 2147483648
    %v1593 = vmul.f32 %v1592, 1.442695
    %v1594 = vpow.pop %v1593
    %v1595 = vadd.f32 %v1594, 1.0
    %v1596 = vrcp.pop %v1595
    %v1597 = vmul.f32 1.0, %v1596
    %v1599 = vrot.slane %v1591, 2
    %v1601 = vxor.u32 %v1599, 2147483648
    %v1602 = vmul.f32 %v1601, 1.442695
    %v1603 = vpow.pop %v1602
    %v1604 = vadd.f32 %v1603, 1.0
    %v1605 = vrcp.pop %v1604
    %v1606 = vmul.f32 1.0, %v1605
    %v1607 = vrot.slane %v1591, 4
    %v1609 = vtanh.pop %v1607
    %v1610 = vrot.slane %v1591, 6
    %v1612 = vxor.u32 %v1610, 2147483648
    %v1613 = vmul.f32 %v1612, 1.442695
    %v1614 = vpow.pop %v1613
    %v1615 = vadd.f32 %v1614, 1.0
    %v1616 = vrcp.pop %v1615
    %v1617 = vmul.f32 1.0, %v1616
    %v1618 = vmul.f32 %v1606, %v1482
    %v1619 = vmul.f32 %v1597, %v1609
    %v1620 = vadd.f32 %v1618, %v1619
    %v1621 = vtanh.pop %v1620
    %v1622 = vmul.f32 %v1617, %v1621
    %v1623 = vld [vmem:[%s564] sm:$0xff]
    %v1624 = vpack.c.bf16 %v1622, %v1622
    %1625 = vmatprep.subr.bf16.mxu0 %v1176
    %1626 = vmatpush1.bf16.msra.mxu0 %v1175
    %1627 = vmatprep.subr.bf16.mxu0 %v1172
    %1628 = vmatpush1.bf16.msra.mxu0 %v1171
    %1629 = vmatprep.subr.bf16.mxu0 %v1168
    %1630 = vmatpush1.bf16.msra.mxu0 %v1167
    %1631 = vmatprep.subr.bf16.mxu0 %v1164
    %1632 = vmatpush1.bf16.msra.mxu0 %v1163
    %1633 = vmatprep.subr.bf16.mxu0 %v1160
    %1634 = vmatpush1.bf16.msra.mxu0 %v1159
    %1635 = vmatprep.subr.bf16.mxu0 %v1156
    %1636 = vmatpush1.bf16.msra.mxu0 %v1155
    %1637 = vmatprep.subr.bf16.mxu0 %v1152
    %1638 = vmatpush1.bf16.msra.mxu0 %v1151
    %1639 = vmatprep.subr.bf16.mxu0 %v1148
    %1640 = vmatpush1.bf16.msra.mxu0 %v1147
    %1641 = vmatprep.subr.bf16.mxu0 0
    %1642 = vmatpush2.bf16.msra.mxu0 0
    %1643 = vmatprep.subr.bf16.mxu0 0
    %1644 = vmatpush2.bf16.msra.mxu0 0
    %1645 = vmatprep.subr.bf16.mxu0 0
    %1646 = vmatpush2.bf16.msra.mxu0 0
    %1647 = vmatprep.subr.bf16.mxu0 0
    %1648 = vmatpush2.bf16.msra.mxu0 0
    %1649 = vmatprep.subr.bf16.mxu0 0
    %1650 = vmatpush2.bf16.msra.mxu0 0
    %1651 = vmatprep.subr.bf16.mxu0 0
    %1652 = vmatpush2.bf16.msra.mxu0 0
    %1653 = vmatprep.subr.bf16.mxu0 0
    %1654 = vmatpush2.bf16.msra.mxu0 0
    %1655 = vmatprep.subr.bf16.mxu0 0
    %1656 = vmatpush2.bf16.msra.mxu0 0
    %1657 = vmatprep.mubr.bf16.mxu0 0
    %1658 = vmatmul.mubr.bf16.gmra.mxu0 %v1624
    %v1659 = vpop.f32.mrf.mxu0
    %v1660 = vadd.f32 0.0, %v1659
    %v1661 = vpop.f32.mrf.mxu0
    %v1662 = vadd.f32 0.0, %v1661
    %v1663 = vpop.f32.mrf.mxu0
    %v1664 = vpop.f32.mrf.mxu0
    %1665 = vdwg.mxu0
    %1666 = vmatprep.subr.bf16.mxu0 %v1178
    %1667 = vmatpush1.bf16.msra.mxu0 %v1177
    %1668 = vmatprep.subr.bf16.mxu0 %v1174
    %1669 = vmatpush1.bf16.msra.mxu0 %v1173
    %1670 = vmatprep.subr.bf16.mxu0 %v1170
    %1671 = vmatpush1.bf16.msra.mxu0 %v1169
    %1672 = vmatprep.subr.bf16.mxu0 %v1166
    %1673 = vmatpush1.bf16.msra.mxu0 %v1165
    %1674 = vmatprep.subr.bf16.mxu0 %v1162
    %1675 = vmatpush1.bf16.msra.mxu0 %v1161
    %1676 = vmatprep.subr.bf16.mxu0 %v1158
    %1677 = vmatpush1.bf16.msra.mxu0 %v1157
    %1678 = vmatprep.subr.bf16.mxu0 %v1154
    %1679 = vmatpush1.bf16.msra.mxu0 %v1153
    %1680 = vmatprep.subr.bf16.mxu0 %v1150
    %1681 = vmatpush1.bf16.msra.mxu0 %v1149
    %1682 = vmatprep.subr.bf16.mxu0 0
    %1683 = vmatpush2.bf16.msra.mxu0 0
    %1684 = vmatprep.subr.bf16.mxu0 0
    %1685 = vmatpush2.bf16.msra.mxu0 0
    %1686 = vmatprep.subr.bf16.mxu0 0
    %1687 = vmatpush2.bf16.msra.mxu0 0
    %1688 = vmatprep.subr.bf16.mxu0 0
    %1689 = vmatpush2.bf16.msra.mxu0 0
    %1690 = vmatprep.subr.bf16.mxu0 0
    %1691 = vmatpush2.bf16.msra.mxu0 0
    %1692 = vmatprep.subr.bf16.mxu0 0
    %1693 = vmatpush2.bf16.msra.mxu0 0
    %1694 = vmatprep.subr.bf16.mxu0 0
    %1695 = vmatpush2.bf16.msra.mxu0 0
    %1696 = vmatprep.subr.bf16.mxu0 0
    %1697 = vmatpush2.bf16.msra.mxu0 0
    %1698 = vmatprep.mubr.bf16.mxu0 0
    %1699 = vmatmul.mubr.bf16.gmra.mxu0 %v1624
    %v1700 = vpop.f32.mrf.mxu0
    %v1701 = vadd.f32 0.0, %v1700
    %v1702 = vpop.f32.mrf.mxu0
    %v1703 = vadd.f32 0.0, %v1702
    %v1704 = vpop.f32.mrf.mxu0
    %v1705 = vpop.f32.mrf.mxu0
    %1706 = vdwg.mxu0
    %v1711 = vcombine.low %v1660, %v1662
    %v1712 = vcombine.low %v1701, %v1703
    %v1714 = vunpack.c.l.s4 1983009808
    %v1715 = vunpack.c.0.s8 %v1714
    %v1716 = vlaneseq
    %v1717 = vshrl.u32 %v1716, 7
    %v1718 = vsub.s32 %v1715, %v1717
    %v1719 = vrot.slane %v1711, %v1718
    %v1721 = vunpack.c.l.s4 1983009808
    %v1722 = vunpack.c.0.s8 %v1721
    %v1723 = vlaneseq
    %v1724 = vshrl.u32 %v1723, 7
    %v1725 = vsub.s32 %v1722, %v1724
    %v1726 = vrot.slane %v1712, %v1725
    %v1727 = vcombine.low %v1719, %v1726
    %v1729 = vadd.f32 %v1623, %v1727
    %v1730 = vxor.u32 %v1729, 2147483648
    %v1731 = vmul.f32 %v1730, 1.442695
    %v1732 = vpow.pop %v1731
    %v1733 = vadd.f32 %v1732, 1.0
    %v1734 = vrcp.pop %v1733
    %v1735 = vmul.f32 1.0, %v1734
    %v1737 = vrot.slane %v1729, 2
    %v1739 = vxor.u32 %v1737, 2147483648
    %v1740 = vmul.f32 %v1739, 1.442695
    %v1741 = vpow.pop %v1740
    %v1742 = vadd.f32 %v1741, 1.0
    %v1743 = vrcp.pop %v1742
    %v1744 = vmul.f32 1.0, %v1743
    %v1745 = vrot.slane %v1729, 4
    %v1747 = vtanh.pop %v1745
    %v1748 = vrot.slane %v1729, 6
    %v1750 = vxor.u32 %v1748, 2147483648
    %v1751 = vmul.f32 %v1750, 1.442695
    %v1752 = vpow.pop %v1751
    %v1753 = vadd.f32 %v1752, 1.0
    %v1754 = vrcp.pop %v1753
    %v1755 = vmul.f32 1.0, %v1754
    %v1756 = vmul.f32 %v1744, %v1620
    %v1757 = vmul.f32 %v1735, %v1747
    %v1758 = vadd.f32 %v1756, %v1757
    %v1759 = vtanh.pop %v1758
    %v1760 = vmul.f32 %v1755, %v1759
    %v1761 = vld [vmem:[%s677] sm:$0xff]
    %v1762 = vpack.c.bf16 %v1760, %v1760
    %1763 = vmatprep.subr.bf16.mxu0 %v1176
    %1764 = vmatpush1.bf16.msra.mxu0 %v1175
    %1765 = vmatprep.subr.bf16.mxu0 %v1172
    %1766 = vmatpush1.bf16.msra.mxu0 %v1171
    %1767 = vmatprep.subr.bf16.mxu0 %v1168
    %1768 = vmatpush1.bf16.msra.mxu0 %v1167
    %1769 = vmatprep.subr.bf16.mxu0 %v1164
    %1770 = vmatpush1.bf16.msra.mxu0 %v1163
    %1771 = vmatprep.subr.bf16.mxu0 %v1160
    %1772 = vmatpush1.bf16.msra.mxu0 %v1159
    %1773 = vmatprep.subr.bf16.mxu0 %v1156
    %1774 = vmatpush1.bf16.msra.mxu0 %v1155
    %1775 = vmatprep.subr.bf16.mxu0 %v1152
    %1776 = vmatpush1.bf16.msra.mxu0 %v1151
    %1777 = vmatprep.subr.bf16.mxu0 %v1148
    %1778 = vmatpush1.bf16.msra.mxu0 %v1147
    %1779 = vmatprep.subr.bf16.mxu0 0
    %1780 = vmatpush2.bf16.msra.mxu0 0
    %1781 = vmatprep.subr.bf16.mxu0 0
    %1782 = vmatpush2.bf16.msra.mxu0 0
    %1783 = vmatprep.subr.bf16.mxu0 0
    %1784 = vmatpush2.bf16.msra.mxu0 0
    %1785 = vmatprep.subr.bf16.mxu0 0
    %1786 = vmatpush2.bf16.msra.mxu0 0
    %1787 = vmatprep.subr.bf16.mxu0 0
    %1788 = vmatpush2.bf16.msra.mxu0 0
    %1789 = vmatprep.subr.bf16.mxu0 0
    %1790 = vmatpush2.bf16.msra.mxu0 0
    %1791 = vmatprep.subr.bf16.mxu0 0
    %1792 = vmatpush2.bf16.msra.mxu0 0
    %1793 = vmatprep.subr.bf16.mxu0 0
    %1794 = vmatpush2.bf16.msra.mxu0 0
    %1795 = vmatprep.mubr.bf16.mxu0 0
    %1796 = vmatmul.mubr.bf16.gmra.mxu0 %v1762
    %v1797 = vpop.f32.mrf.mxu0
    %v1798 = vadd.f32 0.0, %v1797
    %v1799 = vpop.f32.mrf.mxu0
    %v1800 = vadd.f32 0.0, %v1799
    %v1801 = vpop.f32.mrf.mxu0
    %v1802 = vpop.f32.mrf.mxu0
    %1803 = vdwg.mxu0
    %1804 = vmatprep.subr.bf16.mxu0 %v1178
    %1805 = vmatpush1.bf16.msra.mxu0 %v1177
    %1806 = vmatprep.subr.bf16.mxu0 %v1174
    %1807 = vmatpush1.bf16.msra.mxu0 %v1173
    %1808 = vmatprep.subr.bf16.mxu0 %v1170
    %1809 = vmatpush1.bf16.msra.mxu0 %v1169
    %1810 = vmatprep.subr.bf16.mxu0 %v1166
    %1811 = vmatpush1.bf16.msra.mxu0 %v1165
    %1812 = vmatprep.subr.bf16.mxu0 %v1162
    %1813 = vmatpush1.bf16.msra.mxu0 %v1161
    %1814 = vmatprep.subr.bf16.mxu0 %v1158
    %1815 = vmatpush1.bf16.msra.mxu0 %v1157
    %1816 = vmatprep.subr.bf16.mxu0 %v1154
    %1817 = vmatpush1.bf16.msra.mxu0 %v1153
    %1818 = vmatprep.subr.bf16.mxu0 %v1150
    %1819 = vmatpush1.bf16.msra.mxu0 %v1149
    %1820 = vmatprep.subr.bf16.mxu0 0
    %1821 = vmatpush2.bf16.msra.mxu0 0
    %1822 = vmatprep.subr.bf16.mxu0 0
    %1823 = vmatpush2.bf16.msra.mxu0 0
    %1824 = vmatprep.subr.bf16.mxu0 0
    %1825 = vmatpush2.bf16.msra.mxu0 0
    %1826 = vmatprep.subr.bf16.mxu0 0
    %1827 = vmatpush2.bf16.msra.mxu0 0
    %1828 = vmatprep.subr.bf16.mxu0 0
    %1829 = vmatpush2.bf16.msra.mxu0 0
    %1830 = vmatprep.subr.bf16.mxu0 0
    %1831 = vmatpush2.bf16.msra.mxu0 0
    %1832 = vmatprep.subr.bf16.mxu0 0
    %1833 = vmatpush2.bf16.msra.mxu0 0
    %1834 = vmatprep.subr.bf16.mxu0 0
    %1835 = vmatpush2.bf16.msra.mxu0 0
    %1836 = vmatprep.mubr.bf16.mxu0 0
    %1837 = vmatmul.mubr.bf16.gmra.mxu0 %v1762
    %v1838 = vpop.f32.mrf.mxu0
    %v1839 = vadd.f32 0.0, %v1838
    %v1840 = vpop.f32.mrf.mxu0
    %v1841 = vadd.f32 0.0, %v1840
    %v1842 = vpop.f32.mrf.mxu0
    %v1843 = vpop.f32.mrf.mxu0
    %1844 = vdwg.mxu0
    %v1849 = vcombine.low %v1798, %v1800
    %v1850 = vcombine.low %v1839, %v1841
    %v1852 = vunpack.c.l.s4 1983009808
    %v1853 = vunpack.c.0.s8 %v1852
    %v1854 = vlaneseq
    %v1855 = vshrl.u32 %v1854, 7
    %v1856 = vsub.s32 %v1853, %v1855
    %v1857 = vrot.slane %v1849, %v1856
    %v1859 = vunpack.c.l.s4 1983009808
    %v1860 = vunpack.c.0.s8 %v1859
    %v1861 = vlaneseq
    %v1862 = vshrl.u32 %v1861, 7
    %v1863 = vsub.s32 %v1860, %v1862
    %v1864 = vrot.slane %v1850, %v1863
    %v1865 = vcombine.low %v1857, %v1864
    %v1867 = vadd.f32 %v1761, %v1865
    %v1868 = vxor.u32 %v1867, 2147483648
    %v1869 = vmul.f32 %v1868, 1.442695
    %v1870 = vpow.pop %v1869
    %v1871 = vadd.f32 %v1870, 1.0
    %v1872 = vrcp.pop %v1871
    %v1873 = vmul.f32 1.0, %v1872
    %v1875 = vrot.slane %v1867, 2
    %v1877 = vxor.u32 %v1875, 2147483648
    %v1878 = vmul.f32 %v1877, 1.442695
    %v1879 = vpow.pop %v1878
    %v1880 = vadd.f32 %v1879, 1.0
    %v1881 = vrcp.pop %v1880
    %v1882 = vmul.f32 1.0, %v1881
    %v1883 = vrot.slane %v1867, 4
    %v1885 = vtanh.pop %v1883
    %v1886 = vrot.slane %v1867, 6
    %v1888 = vxor.u32 %v1886, 2147483648
    %v1889 = vmul.f32 %v1888, 1.442695
    %v1890 = vpow.pop %v1889
    %v1891 = vadd.f32 %v1890, 1.0
    %v1892 = vrcp.pop %v1891
    %v1893 = vmul.f32 1.0, %v1892
    %v1894 = vmul.f32 %v1882, %v1758
    %v1895 = vmul.f32 %v1873, %v1885
    %v1896 = vadd.f32 %v1894, %v1895
    %v1897 = vtanh.pop %v1896
    %v1898 = vmul.f32 %v1893, %v1897
    %v1899 = vld [vmem:[%s790] sm:$0xff]
    %v1900 = vpack.c.bf16 %v1898, %v1898
    %1901 = vmatprep.subr.bf16.mxu0 %v1176
    %1902 = vmatpush1.bf16.msra.mxu0 %v1175
    %1903 = vmatprep.subr.bf16.mxu0 %v1172
    %1904 = vmatpush1.bf16.msra.mxu0 %v1171
    %1905 = vmatprep.subr.bf16.mxu0 %v1168
    %1906 = vmatpush1.bf16.msra.mxu0 %v1167
    %1907 = vmatprep.subr.bf16.mxu0 %v1164
    %1908 = vmatpush1.bf16.msra.mxu0 %v1163
    %1909 = vmatprep.subr.bf16.mxu0 %v1160
    %1910 = vmatpush1.bf16.msra.mxu0 %v1159
    %1911 = vmatprep.subr.bf16.mxu0 %v1156
    %1912 = vmatpush1.bf16.msra.mxu0 %v1155
    %1913 = vmatprep.subr.bf16.mxu0 %v1152
    %1914 = vmatpush1.bf16.msra.mxu0 %v1151
    %1915 = vmatprep.subr.bf16.mxu0 %v1148
    %1916 = vmatpush1.bf16.msra.mxu0 %v1147
    %1917 = vmatprep.subr.bf16.mxu0 0
    %1918 = vmatpush2.bf16.msra.mxu0 0
    %1919 = vmatprep.subr.bf16.mxu0 0
    %1920 = vmatpush2.bf16.msra.mxu0 0
    %1921 = vmatprep.subr.bf16.mxu0 0
    %1922 = vmatpush2.bf16.msra.mxu0 0
    %1923 = vmatprep.subr.bf16.mxu0 0
    %1924 = vmatpush2.bf16.msra.mxu0 0
    %1925 = vmatprep.subr.bf16.mxu0 0
    %1926 = vmatpush2.bf16.msra.mxu0 0
    %1927 = vmatprep.subr.bf16.mxu0 0
    %1928 = vmatpush2.bf16.msra.mxu0 0
    %1929 = vmatprep.subr.bf16.mxu0 0
    %1930 = vmatpush2.bf16.msra.mxu0 0
    %1931 = vmatprep.subr.bf16.mxu0 0
    %1932 = vmatpush2.bf16.msra.mxu0 0
    %1933 = vmatprep.mubr.bf16.mxu0 0
    %1934 = vmatmul.mubr.bf16.gmra.mxu0 %v1900
    %v1935 = vpop.f32.mrf.mxu0
    %v1936 = vadd.f32 0.0, %v1935
    %v1937 = vpop.f32.mrf.mxu0
    %v1938 = vadd.f32 0.0, %v1937
    %v1939 = vpop.f32.mrf.mxu0
    %v1940 = vpop.f32.mrf.mxu0
    %1941 = vdwg.mxu0
    %1942 = vmatprep.subr.bf16.mxu0 %v1178
    %1943 = vmatpush1.bf16.msra.mxu0 %v1177
    %1944 = vmatprep.subr.bf16.mxu0 %v1174
    %1945 = vmatpush1.bf16.msra.mxu0 %v1173
    %1946 = vmatprep.subr.bf16.mxu0 %v1170
    %1947 = vmatpush1.bf16.msra.mxu0 %v1169
    %1948 = vmatprep.subr.bf16.mxu0 %v1166
    %1949 = vmatpush1.bf16.msra.mxu0 %v1165
    %1950 = vmatprep.subr.bf16.mxu0 %v1162
    %1951 = vmatpush1.bf16.msra.mxu0 %v1161
    %1952 = vmatprep.subr.bf16.mxu0 %v1158
    %1953 = vmatpush1.bf16.msra.mxu0 %v1157
    %1954 = vmatprep.subr.bf16.mxu0 %v1154
    %1955 = vmatpush1.bf16.msra.mxu0 %v1153
    %1956 = vmatprep.subr.bf16.mxu0 %v1150
    %1957 = vmatpush1.bf16.msra.mxu0 %v1149
    %1958 = vmatprep.subr.bf16.mxu0 0
    %1959 = vmatpush2.bf16.msra.mxu0 0
    %1960 = vmatprep.subr.bf16.mxu0 0
    %1961 = vmatpush2.bf16.msra.mxu0 0
    %1962 = vmatprep.subr.bf16.mxu0 0
    %1963 = vmatpush2.bf16.msra.mxu0 0
    %1964 = vmatprep.subr.bf16.mxu0 0
    %1965 = vmatpush2.bf16.msra.mxu0 0
    %1966 = vmatprep.subr.bf16.mxu0 0
    %1967 = vmatpush2.bf16.msra.mxu0 0
    %1968 = vmatprep.subr.bf16.mxu0 0
    %1969 = vmatpush2.bf16.msra.mxu0 0
    %1970 = vmatprep.subr.bf16.mxu0 0
    %1971 = vmatpush2.bf16.msra.mxu0 0
    %1972 = vmatprep.subr.bf16.mxu0 0
    %1973 = vmatpush2.bf16.msra.mxu0 0
    %1974 = vmatprep.mubr.bf16.mxu0 0
    %1975 = vmatmul.mubr.bf16.gmra.mxu0 %v1900
    %v1976 = vpop.f32.mrf.mxu0
    %v1977 = vadd.f32 0.0, %v1976
    %v1978 = vpop.f32.mrf.mxu0
    %v1979 = vadd.f32 0.0, %v1978
    %v1980 = vpop.f32.mrf.mxu0
    %v1981 = vpop.f32.mrf.mxu0
    %1982 = vdwg.mxu0
    %v1987 = vcombine.low %v1936, %v1938
    %v1988 = vcombine.low %v1977, %v1979
    %v1990 = vunpack.c.l.s4 1983009808
    %v1991 = vunpack.c.0.s8 %v1990
    %v1992 = vlaneseq
    %v1993 = vshrl.u32 %v1992, 7
    %v1994 = vsub.s32 %v1991, %v1993
    %v1995 = vrot.slane %v1987, %v1994
    %v1997 = vunpack.c.l.s4 1983009808
    %v1998 = vunpack.c.0.s8 %v1997
    %v1999 = vlaneseq
    %v2000 = vshrl.u32 %v1999, 7
    %v2001 = vsub.s32 %v1998, %v2000
    %v2002 = vrot.slane %v1988, %v2001
    %v2003 = vcombine.low %v1995, %v2002
    %v2005 = vadd.f32 %v1899, %v2003
    %v2006 = vxor.u32 %v2005, 2147483648
    %v2007 = vmul.f32 %v2006, 1.442695
    %v2008 = vpow.pop %v2007
    %v2009 = vadd.f32 %v2008, 1.0
    %v2010 = vrcp.pop %v2009
    %v2011 = vmul.f32 1.0, %v2010
    %v2013 = vrot.slane %v2005, 2
    %v2015 = vxor.u32 %v2013, 2147483648
    %v2016 = vmul.f32 %v2015, 1.442695
    %v2017 = vpow.pop %v2016
    %v2018 = vadd.f32 %v2017, 1.0
    %v2019 = vrcp.pop %v2018
    %v2020 = vmul.f32 1.0, %v2019
    %v2021 = vrot.slane %v2005, 4
    %v2023 = vtanh.pop %v2021
    %v2024 = vrot.slane %v2005, 6
    %v2026 = vxor.u32 %v2024, 2147483648
    %v2027 = vmul.f32 %v2026, 1.442695
    %v2028 = vpow.pop %v2027
    %v2029 = vadd.f32 %v2028, 1.0
    %v2030 = vrcp.pop %v2029
    %v2031 = vmul.f32 1.0, %v2030
    %v2032 = vmul.f32 %v2020, %v1896
    %v2033 = vmul.f32 %v2011, %v2023
    %v2034 = vadd.f32 %v2032, %v2033
    %v2035 = vtanh.pop %v2034
    %v2036 = vmul.f32 %v2031, %v2035
    %v2037 = vld [vmem:[%s903] sm:$0xff]
    %v2038 = vpack.c.bf16 %v2036, %v2036
    %2039 = vmatprep.subr.bf16.mxu0 %v1176
    %2040 = vmatpush1.bf16.msra.mxu0 %v1175
    %2041 = vmatprep.subr.bf16.mxu0 %v1172
    %2042 = vmatpush1.bf16.msra.mxu0 %v1171
    %2043 = vmatprep.subr.bf16.mxu0 %v1168
    %2044 = vmatpush1.bf16.msra.mxu0 %v1167
    %2045 = vmatprep.subr.bf16.mxu0 %v1164
    %2046 = vmatpush1.bf16.msra.mxu0 %v1163
    %2047 = vmatprep.subr.bf16.mxu0 %v1160
    %2048 = vmatpush1.bf16.msra.mxu0 %v1159
    %2049 = vmatprep.subr.bf16.mxu0 %v1156
    %2050 = vmatpush1.bf16.msra.mxu0 %v1155
    %2051 = vmatprep.subr.bf16.mxu0 %v1152
    %2052 = vmatpush1.bf16.msra.mxu0 %v1151
    %2053 = vmatprep.subr.bf16.mxu0 %v1148
    %2054 = vmatpush1.bf16.msra.mxu0 %v1147
    %2055 = vmatprep.subr.bf16.mxu0 0
    %2056 = vmatpush2.bf16.msra.mxu0 0
    %2057 = vmatprep.subr.bf16.mxu0 0
    %2058 = vmatpush2.bf16.msra.mxu0 0
    %2059 = vmatprep.subr.bf16.mxu0 0
    %2060 = vmatpush2.bf16.msra.mxu0 0
    %2061 = vmatprep.subr.bf16.mxu0 0
    %2062 = vmatpush2.bf16.msra.mxu0 0
    %2063 = vmatprep.subr.bf16.mxu0 0
    %2064 = vmatpush2.bf16.msra.mxu0 0
    %2065 = vmatprep.subr.bf16.mxu0 0
    %2066 = vmatpush2.bf16.msra.mxu0 0
    %2067 = vmatprep.subr.bf16.mxu0 0
    %2068 = vmatpush2.bf16.msra.mxu0 0
    %2069 = vmatprep.subr.bf16.mxu0 0
    %2070 = vmatpush2.bf16.msra.mxu0 0
    %2071 = vmatprep.mubr.bf16.mxu0 0
    %2072 = vmatmul.mubr.bf16.gmra.mxu0 %v2038
    %v2073 = vpop.f32.mrf.mxu0
    %v2074 = vadd.f32 0.0, %v2073
    %v2075 = vpop.f32.mrf.mxu0
    %v2076 = vadd.f32 0.0, %v2075
    %v2077 = vpop.f32.mrf.mxu0
    %v2078 = vpop.f32.mrf.mxu0
    %2079 = vdwg.mxu0
    %2080 = vmatprep.subr.bf16.mxu0 %v1178
    %2081 = vmatpush1.bf16.msra.mxu0 %v1177
    %2082 = vmatprep.subr.bf16.mxu0 %v1174
    %2083 = vmatpush1.bf16.msra.mxu0 %v1173
    %2084 = vmatprep.subr.bf16.mxu0 %v1170
    %2085 = vmatpush1.bf16.msra.mxu0 %v1169
    %2086 = vmatprep.subr.bf16.mxu0 %v1166
    %2087 = vmatpush1.bf16.msra.mxu0 %v1165
    %2088 = vmatprep.subr.bf16.mxu0 %v1162
    %2089 = vmatpush1.bf16.msra.mxu0 %v1161
    %2090 = vmatprep.subr.bf16.mxu0 %v1158
    %2091 = vmatpush1.bf16.msra.mxu0 %v1157
    %2092 = vmatprep.subr.bf16.mxu0 %v1154
    %2093 = vmatpush1.bf16.msra.mxu0 %v1153
    %2094 = vmatprep.subr.bf16.mxu0 %v1150
    %2095 = vmatpush1.bf16.msra.mxu0 %v1149
    %2096 = vmatprep.subr.bf16.mxu0 0
    %2097 = vmatpush2.bf16.msra.mxu0 0
    %2098 = vmatprep.subr.bf16.mxu0 0
    %2099 = vmatpush2.bf16.msra.mxu0 0
    %2100 = vmatprep.subr.bf16.mxu0 0
    %2101 = vmatpush2.bf16.msra.mxu0 0
    %2102 = vmatprep.subr.bf16.mxu0 0
    %2103 = vmatpush2.bf16.msra.mxu0 0
    %2104 = vmatprep.subr.bf16.mxu0 0
    %2105 = vmatpush2.bf16.msra.mxu0 0
    %2106 = vmatprep.subr.bf16.mxu0 0
    %2107 = vmatpush2.bf16.msra.mxu0 0
    %2108 = vmatprep.subr.bf16.mxu0 0
    %2109 = vmatpush2.bf16.msra.mxu0 0
    %2110 = vmatprep.subr.bf16.mxu0 0
    %2111 = vmatpush2.bf16.msra.mxu0 0
    %2112 = vmatprep.mubr.bf16.mxu0 0
    %2113 = vmatmul.mubr.bf16.gmra.mxu0 %v2038
    %v2114 = vpop.f32.mrf.mxu0
    %v2115 = vadd.f32 0.0, %v2114
    %v2116 = vpop.f32.mrf.mxu0
    %v2117 = vadd.f32 0.0, %v2116
    %v2118 = vpop.f32.mrf.mxu0
    %v2119 = vpop.f32.mrf.mxu0
    %2120 = vdwg.mxu0
    %v2125 = vcombine.low %v2074, %v2076
    %v2126 = vcombine.low %v2115, %v2117
    %v2128 = vunpack.c.l.s4 1983009808
    %v2129 = vunpack.c.0.s8 %v2128
    %v2130 = vlaneseq
    %v2131 = vshrl.u32 %v2130, 7
    %v2132 = vsub.s32 %v2129, %v2131
    %v2133 = vrot.slane %v2125, %v2132
    %v2135 = vunpack.c.l.s4 1983009808
    %v2136 = vunpack.c.0.s8 %v2135
    %v2137 = vlaneseq
    %v2138 = vshrl.u32 %v2137, 7
    %v2139 = vsub.s32 %v2136, %v2138
    %v2140 = vrot.slane %v2126, %v2139
    %v2141 = vcombine.low %v2133, %v2140
    %v2143 = vadd.f32 %v2037, %v2141
    %v2144 = vxor.u32 %v2143, 2147483648
    %v2145 = vmul.f32 %v2144, 1.442695
    %v2146 = vpow.pop %v2145
    %v2147 = vadd.f32 %v2146, 1.0
    %v2148 = vrcp.pop %v2147
    %v2149 = vmul.f32 1.0, %v2148
    %v2151 = vrot.slane %v2143, 2
    %v2153 = vxor.u32 %v2151, 2147483648
    %v2154 = vmul.f32 %v2153, 1.442695
    %v2155 = vpow.pop %v2154
    %v2156 = vadd.f32 %v2155, 1.0
    %v2157 = vrcp.pop %v2156
    %v2158 = vmul.f32 1.0, %v2157
    %v2159 = vrot.slane %v2143, 4
    %v2161 = vtanh.pop %v2159
    %v2162 = vrot.slane %v2143, 6
    %v2164 = vxor.u32 %v2162, 2147483648
    %v2165 = vmul.f32 %v2164, 1.442695
    %v2166 = vpow.pop %v2165
    %v2167 = vadd.f32 %v2166, 1.0
    %v2168 = vrcp.pop %v2167
    %v2169 = vmul.f32 1.0, %v2168
    %v2170 = vmul.f32 %v2158, %v2034
    %v2171 = vmul.f32 %v2149, %v2161
    %v2172 = vadd.f32 %v2170, %v2171
    %v2173 = vtanh.pop %v2172
    %v2174 = vmul.f32 %v2169, %v2173
    %v2175 = vld [vmem:[%s1016] sm:$0xff]
    %v2176 = vpack.c.bf16 %v2174, %v2174
    %2177 = vmatprep.subr.bf16.mxu0 %v1176
    %2178 = vmatpush1.bf16.msra.mxu0 %v1175
    %2179 = vmatprep.subr.bf16.mxu0 %v1172
    %2180 = vmatpush1.bf16.msra.mxu0 %v1171
    %2181 = vmatprep.subr.bf16.mxu0 %v1168
    %2182 = vmatpush1.bf16.msra.mxu0 %v1167
    %2183 = vmatprep.subr.bf16.mxu0 %v1164
    %2184 = vmatpush1.bf16.msra.mxu0 %v1163
    %2185 = vmatprep.subr.bf16.mxu0 %v1160
    %2186 = vmatpush1.bf16.msra.mxu0 %v1159
    %2187 = vmatprep.subr.bf16.mxu0 %v1156
    %2188 = vmatpush1.bf16.msra.mxu0 %v1155
    %2189 = vmatprep.subr.bf16.mxu0 %v1152
    %2190 = vmatpush1.bf16.msra.mxu0 %v1151
    %2191 = vmatprep.subr.bf16.mxu0 %v1148
    %2192 = vmatpush1.bf16.msra.mxu0 %v1147
    %2193 = vmatprep.subr.bf16.mxu0 0
    %2194 = vmatpush2.bf16.msra.mxu0 0
    %2195 = vmatprep.subr.bf16.mxu0 0
    %2196 = vmatpush2.bf16.msra.mxu0 0
    %2197 = vmatprep.subr.bf16.mxu0 0
    %2198 = vmatpush2.bf16.msra.mxu0 0
    %2199 = vmatprep.subr.bf16.mxu0 0
    %2200 = vmatpush2.bf16.msra.mxu0 0
    %2201 = vmatprep.subr.bf16.mxu0 0
    %2202 = vmatpush2.bf16.msra.mxu0 0
    %2203 = vmatprep.subr.bf16.mxu0 0
    %2204 = vmatpush2.bf16.msra.mxu0 0
    %2205 = vmatprep.subr.bf16.mxu0 0
    %2206 = vmatpush2.bf16.msra.mxu0 0
    %2207 = vmatprep.subr.bf16.mxu0 0
    %2208 = vmatpush2.bf16.msra.mxu0 0
    %2209 = vmatprep.mubr.bf16.mxu0 0
    %2210 = vmatmul.mubr.bf16.gmra.mxu0 %v2176
    %v2211 = vpop.f32.mrf.mxu0
    %v2212 = vadd.f32 0.0, %v2211
    %v2213 = vpop.f32.mrf.mxu0
    %v2214 = vadd.f32 0.0, %v2213
    %v2215 = vpop.f32.mrf.mxu0
    %v2216 = vpop.f32.mrf.mxu0
    %2217 = vdwg.mxu0
    %2218 = vmatprep.subr.bf16.mxu0 %v1178
    %2219 = vmatpush1.bf16.msra.mxu0 %v1177
    %2220 = vmatprep.subr.bf16.mxu0 %v1174
    %2221 = vmatpush1.bf16.msra.mxu0 %v1173
    %2222 = vmatprep.subr.bf16.mxu0 %v1170
    %2223 = vmatpush1.bf16.msra.mxu0 %v1169
    %2224 = vmatprep.subr.bf16.mxu0 %v1166
    %2225 = vmatpush1.bf16.msra.mxu0 %v1165
    %2226 = vmatprep.subr.bf16.mxu0 %v1162
    %2227 = vmatpush1.bf16.msra.mxu0 %v1161
    %2228 = vmatprep.subr.bf16.mxu0 %v1158
    %2229 = vmatpush1.bf16.msra.mxu0 %v1157
    %2230 = vmatprep.subr.bf16.mxu0 %v1154
    %2231 = vmatpush1.bf16.msra.mxu0 %v1153
    %2232 = vmatprep.subr.bf16.mxu0 %v1150
    %2233 = vmatpush1.bf16.msra.mxu0 %v1149
    %2234 = vmatprep.subr.bf16.mxu0 0
    %2235 = vmatpush2.bf16.msra.mxu0 0
    %2236 = vmatprep.subr.bf16.mxu0 0
    %2237 = vmatpush2.bf16.msra.mxu0 0
    %2238 = vmatprep.subr.bf16.mxu0 0
    %2239 = vmatpush2.bf16.msra.mxu0 0
    %2240 = vmatprep.subr.bf16.mxu0 0
    %2241 = vmatpush2.bf16.msra.mxu0 0
    %2242 = vmatprep.subr.bf16.mxu0 0
    %2243 = vmatpush2.bf16.msra.mxu0 0
    %2244 = vmatprep.subr.bf16.mxu0 0
    %2245 = vmatpush2.bf16.msra.mxu0 0
    %2246 = vmatprep.subr.bf16.mxu0 0
    %2247 = vmatpush2.bf16.msra.mxu0 0
    %2248 = vmatprep.subr.bf16.mxu0 0
    %2249 = vmatpush2.bf16.msra.mxu0 0
    %2250 = vmatprep.mubr.bf16.mxu0 0
    %2251 = vmatmul.mubr.bf16.gmra.mxu0 %v2176
    %v2252 = vpop.f32.mrf.mxu0
    %v2253 = vadd.f32 0.0, %v2252
    %v2254 = vpop.f32.mrf.mxu0
    %v2255 = vadd.f32 0.0, %v2254
    %v2256 = vpop.f32.mrf.mxu0
    %v2257 = vpop.f32.mrf.mxu0
    %2258 = vdwg.mxu0
    %v2263 = vcombine.low %v2212, %v2214
    %v2264 = vcombine.low %v2253, %v2255
    %v2266 = vunpack.c.l.s4 1983009808
    %v2267 = vunpack.c.0.s8 %v2266
    %v2268 = vlaneseq
    %v2269 = vshrl.u32 %v2268, 7
    %v2270 = vsub.s32 %v2267, %v2269
    %v2271 = vrot.slane %v2263, %v2270
    %v2273 = vunpack.c.l.s4 1983009808
    %v2274 = vunpack.c.0.s8 %v2273
    %v2275 = vlaneseq
    %v2276 = vshrl.u32 %v2275, 7
    %v2277 = vsub.s32 %v2274, %v2276
    %v2278 = vrot.slane %v2264, %v2277
    %v2279 = vcombine.low %v2271, %v2278
    %v2281 = vadd.f32 %v2175, %v2279
    %v2282 = vxor.u32 %v2281, 2147483648
    %v2283 = vmul.f32 %v2282, 1.442695
    %v2284 = vpow.pop %v2283
    %v2285 = vadd.f32 %v2284, 1.0
    %v2286 = vrcp.pop %v2285
    %v2287 = vmul.f32 1.0, %v2286
    %v2289 = vrot.slane %v2281, 2
    %v2291 = vxor.u32 %v2289, 2147483648
    %v2292 = vmul.f32 %v2291, 1.442695
    %v2293 = vpow.pop %v2292
    %v2294 = vadd.f32 %v2293, 1.0
    %v2295 = vrcp.pop %v2294
    %v2296 = vmul.f32 1.0, %v2295
    %v2297 = vrot.slane %v2281, 4
    %v2299 = vtanh.pop %v2297
    %v2300 = vrot.slane %v2281, 6
    %v2302 = vxor.u32 %v2300, 2147483648
    %v2303 = vmul.f32 %v2302, 1.442695
    %v2304 = vpow.pop %v2303
    %v2305 = vadd.f32 %v2304, 1.0
    %v2306 = vrcp.pop %v2305
    %v2307 = vmul.f32 1.0, %v2306
    %v2308 = vmul.f32 %v2296, %v2172
    %v2309 = vmul.f32 %v2287, %v2299
    %v2310 = vadd.f32 %v2308, %v2309
    %v2311 = vtanh.pop %v2310
    %v2312 = vmul.f32 %v2307, %v2311
    %v2313 = vpack.c.bf16 %v2312, %v2312
    %v2314 = vld [vmem:[#allocation6] sm:$0xf]
    %v2315 = vld [vmem:[#allocation6 + $0x4] sm:$0xf]
    %v2316 = vld [vmem:[#allocation6 + $0x8] sm:$0xf]
    %v2317 = vld [vmem:[#allocation6 + $0xc] sm:$0xf]
    %v2318 = vld [vmem:[#allocation6 + $0x10] sm:$0xf]
    %v2319 = vld [vmem:[#allocation6 + $0x14] sm:$0xf]
    %v2320 = vld [vmem:[#allocation6 + $0x18] sm:$0xf]
    %v2321 = vld [vmem:[#allocation6 + $0x1c] sm:$0xf]
    %v2322 = vld [vmem:[#allocation6 + $0x20] sm:$0xf]
    %v2323 = vld [vmem:[#allocation6 + $0x24] sm:$0xf]
    %v2324 = vld [vmem:[#allocation6 + $0x28] sm:$0xf]
    %v2325 = vld [vmem:[#allocation6 + $0x2c] sm:$0xf]
    %v2326 = vld [vmem:[#allocation6 + $0x30] sm:$0xf]
    %v2327 = vld [vmem:[#allocation6 + $0x34] sm:$0xf]
    %v2328 = vld [vmem:[#allocation6 + $0x38] sm:$0xf]
    %v2329 = vld [vmem:[#allocation6 + $0x3c] sm:$0xf]
    %v2330 = vld [vmem:[%s5] sm:$0x1]
    %v2332 = vlaneseq
    %v2333 = vshrl.u32 %v2332, 7
    %v2334 = vsub.s32 0, %v2333
    %v2335 = vrot.slane %v2330, %v2334
    %v2353 = vunpack.c.l.b16 %v2314
    %v2354 = vunpack.c.l.b16 %v2315
    %v2355 = vunpack.c.l.b16 %v2316
    %v2356 = vunpack.c.l.b16 %v2317
    %v2357 = vunpack.c.l.b16 %v2318
    %v2358 = vunpack.c.l.b16 %v2319
    %v2359 = vunpack.c.l.b16 %v2320
    %v2360 = vunpack.c.l.b16 %v2321
    %v2361 = vunpack.c.l.b16 %v2322
    %v2362 = vunpack.c.l.b16 %v2323
    %v2363 = vunpack.c.l.b16 %v2324
    %v2364 = vunpack.c.l.b16 %v2325
    %v2365 = vunpack.c.l.b16 %v2326
    %v2366 = vunpack.c.l.b16 %v2327
    %v2367 = vunpack.c.l.b16 %v2328
    %v2368 = vunpack.c.l.b16 %v2329
    %v2369 = vpack.c.b16 %v2354, %v2353
    %v2370 = vpack.c.b16 %v2356, %v2355
    %v2371 = vpack.c.b16 %v2358, %v2357
    %v2372 = vpack.c.b16 %v2360, %v2359
    %v2373 = vpack.c.b16 %v2362, %v2361
    %v2374 = vpack.c.b16 %v2364, %v2363
    %v2375 = vpack.c.b16 %v2366, %v2365
    %v2376 = vpack.c.b16 %v2368, %v2367
    %2385 = vmatprep.subr.bf16.mxu0 0
    %2386 = vmatpush1.bf16.msra.mxu0 %v2376
    %2387 = vmatprep.subr.bf16.mxu0 0
    %2388 = vmatpush1.bf16.msra.mxu0 %v2375
    %2389 = vmatprep.subr.bf16.mxu0 0
    %2390 = vmatpush1.bf16.msra.mxu0 %v2374
    %2391 = vmatprep.subr.bf16.mxu0 0
    %2392 = vmatpush1.bf16.msra.mxu0 %v2373
    %2393 = vmatprep.subr.bf16.mxu0 0
    %2394 = vmatpush1.bf16.msra.mxu0 %v2372
    %2395 = vmatprep.subr.bf16.mxu0 0
    %2396 = vmatpush1.bf16.msra.mxu0 %v2371
    %2397 = vmatprep.subr.bf16.mxu0 0
    %2398 = vmatpush1.bf16.msra.mxu0 %v2370
    %2399 = vmatprep.subr.bf16.mxu0 0
    %2400 = vmatpush1.bf16.msra.mxu0 %v2369
    %2401 = vmatprep.subr.bf16.mxu0 0
    %2402 = vmatpush2.bf16.msra.mxu0 0
    %2403 = vmatprep.subr.bf16.mxu0 0
    %2404 = vmatpush2.bf16.msra.mxu0 0
    %2405 = vmatprep.subr.bf16.mxu0 0
    %2406 = vmatpush2.bf16.msra.mxu0 0
    %2407 = vmatprep.subr.bf16.mxu0 0
    %2408 = vmatpush2.bf16.msra.mxu0 0
    %2409 = vmatprep.subr.bf16.mxu0 0
    %2410 = vmatpush2.bf16.msra.mxu0 0
    %2411 = vmatprep.subr.bf16.mxu0 0
    %2412 = vmatpush2.bf16.msra.mxu0 0
    %2413 = vmatprep.subr.bf16.mxu0 0
    %2414 = vmatpush2.bf16.msra.mxu0 0
    %2415 = vmatprep.subr.bf16.mxu0 0
    %2416 = vmatpush2.bf16.msra.mxu0 0
    %2417 = vmatprep.mubr.bf16.mxu0 0
    %2418 = vmatmul.mubr.bf16.gmra.mxu0 %v2313
    %v2419 = vpop.f32.mrf.mxu0
    %v2420 = vadd.f32 %v2335, %v2419
    %v2421 = vpop.f32.mrf.mxu0
    %v2422 = vpop.f32.mrf.mxu0
    %v2423 = vpop.f32.mrf.mxu0
    %2424 = vdwg.mxu0
    %2425 = vst [vmem:[#allocation8] sm:$0x3] %v2420
    // Predicated region
    $region34: #{tpu_custom_call.1} parent=1 // pred_check
      _
    $region35: #{tpu_custom_call.1} parent=1 // pred_check_branch
      %2427 = sbr.rel (0) target = $region37
    $region36: #{tpu_custom_call.1} parent=1 // pred_region
      %s2429 = ssub.s32 32, 32
      %2430 = vsyncadd [#allocation5], %s2429
      %s2432 = sshll.u32 [#allocation8], 4
      %s2433 = int_to_ptr.vmem [resolvable:$true] %s2432
      %2435 = dma.vmem_to_hbm [thread:$0]  %s2433, 32, %s6, [#allocation5]
    $region37: #{tpu_custom_call.1} parent=1 // pred_fallthru
      _
    // Predicated region
    $region38: #{tpu_custom_call.1} parent=1 // pred_check
      _
    $region39: #{tpu_custom_call.1} parent=1 // pred_check_branch
      %2437 = sbr.rel (0) target = $region41
    $region40: #{tpu_custom_call.1} parent=1 // pred_region
      %2438 = dma.done [#allocation5], 32
    $region41: #{tpu_custom_call.1} parent=1 // pred_fallthru
      _
    %2439 = vsyncpa [#allocation4], 1
    %2440 = vsyncpa [#allocation7], 1
    %2441 = vsyncpa [#allocation5], 1

</llo_original>
